<compile_context>
chip_gen: v7x
topology: tpu7x:2x2x1
jax: 0.10.0
libtpu: 0.0.40
codegen_flags: <defaults>
</compile_context>

<pallas_src>
import functools

import jax
import jax.numpy as jnp
from jax import lax
from jax.experimental import pallas as pl
from jax.experimental.pallas import tpu as pltpu


def _dense_block_kernel(x_ref, mask_ref, scale_ref, shift_ref, *rest,
                        num_layers, in_channels, growth_rate, H, W, residual):
    """Fused DenseBlock forward for one batch item.

    x_ref:     (1, Cin0, H*W)        raw input, channel-major, lane-dense
    mask_ref:  (9, H*W)              per-tap border-validity masks (1.0 / 0.0)
    scale_ref: (C_in_max, L)         folded BN scale, column l = layer l
    shift_ref: (C_in_max, L)         folded BN shift
    rest:      w_0..w_{L-1}          (growth, 9*Cin_l)  conv weights, K = (tap, ci)
               o_ref                 (1, C_out, H*W)
               feat_ref              VMEM (Cin0 + L*growth, H*W)   raw concatenated features
               act_ref               VMEM (C_in_max, H*W + 2*(W+1)) zero-margined activation staging
               col_ref               VMEM (9*C_in_max, H*W)         im2col buffer
    """
    w_refs = rest[:num_layers]
    o_ref = rest[num_layers]
    feat_ref, act_ref, col_ref = rest[num_layers + 1:]

    HW = H * W
    LPAD = W + 1  # margin so every shifted read stays in bounds

    # Zero the staging buffer once; the margins must stay zero, the interior is
    # overwritten every layer.
    act_ref[...] = jnp.zeros_like(act_ref)

    # Seed the (raw) feature buffer with the block input.
    feat_ref[0:in_channels, :] = x_ref[0]

    out_off = 0
    if residual:
        o_ref[0, 0:in_channels, :] = x_ref[0].astype(o_ref.dtype)
        out_off = in_channels

    cin = in_channels
    for l in range(num_layers):
        # --- BatchNorm (folded affine) + ReLU over all current feature channels ---
        feat = feat_ref[0:cin, :]                       # (cin, HW)
        scale = scale_ref[0:cin, l:l + 1]               # (cin, 1) -> lane broadcast
        shift = shift_ref[0:cin, l:l + 1]
        act = jnp.maximum(feat * scale + shift, 0.0)    # (cin, HW)

        # Stage the activation so the 9 shifted tap reads are plain ref slices.
        act_ref[0:cin, LPAD:LPAD + HW] = act

        # --- im2col: stack 9 shifted+masked copies along K = 9*cin ---
        t = 0
        for dy in (-1, 0, 1):
            for dx in (-1, 0, 1):
                delta = dy * W + dx
                shifted = act_ref[0:cin, LPAD + delta:LPAD + delta + HW]  # (cin, HW)
                col_ref[t * cin:(t + 1) * cin, :] = shifted * mask_ref[t:t + 1, :]
                t += 1

        # --- single K = 9*cin contraction on the MXU -> (growth, HW), lane-dense ---
        out = lax.dot_general(
            w_refs[l][...], col_ref[0:9 * cin, :],
            dimension_numbers=(((1,), (0,)), ((), ())),
            preferred_element_type=jnp.float32,
        )
        # Dropout(0.2) is identity in inference mode.

        # Dense concatenation: conv output becomes new raw feature channels.
        feat_ref[cin:cin + growth_rate, :] = out
        o_ref[0, out_off:out_off + growth_rate, :] = out.astype(o_ref.dtype)

        cin += growth_rate
        out_off += growth_rate


def _make_tap_masks(H, W):
    """(9, H*W) float masks: valid(q, tap) for output pixel q and tap (dy, dx)."""
    ys, xs = jnp.meshgrid(jnp.arange(H), jnp.arange(W), indexing="ij")
    masks = []
    for dy in (-1, 0, 1):
        for dx in (-1, 0, 1):
            valid = ((ys + dy >= 0) & (ys + dy < H) &
                     (xs + dx >= 0) & (xs + dx < W))
            masks.append(valid.reshape(-1))
    return jnp.stack(masks).astype(jnp.float32)


def dense_block_pallas(x_nchw, layer_params, residual=False):
    """DenseBlock forward. Input/output are NCHW (PyTorch convention)."""
    N, C0, H, W = x_nchw.shape
    L = len(layer_params)
    growth = layer_params[0][2].shape[-1]   # w_hwio is (3, 3, cin, cout)
    HW = H * W

    x_flat = x_nchw.reshape(N, C0, HW)

    C_in_max = C0 + (L - 1) * growth
    scale_pack = jnp.zeros((C_in_max, L), jnp.float32)
    shift_pack = jnp.zeros((C_in_max, L), jnp.float32)
    w_list = []
    for l, (scale, shift, w_hwio) in enumerate(layer_params):
        cin = scale.shape[0]
        scale_pack = scale_pack.at[:cin, l].set(scale)
        shift_pack = shift_pack.at[:cin, l].set(shift)
        # (3,3,cin,cout) -> K-major (cout, 9*cin) with K index = (ky*3+kx)*cin + ci
        w_list.append(jnp.transpose(w_hwio.reshape(9 * cin, growth), (1, 0)))

    masks = _make_tap_masks(H, W)

    C_out = (C0 if residual else 0) + L * growth
    kernel = functools.partial(
        _dense_block_kernel, num_layers=L, in_channels=C0,
        growth_rate=growth, H=H, W=W, residual=residual)

    in_specs = [
        pl.BlockSpec((1, C0, HW), lambda n: (n, 0, 0)),
        pl.BlockSpec((9, HW), lambda n: (0, 0)),
        pl.BlockSpec((C_in_max, L), lambda n: (0, 0)),
        pl.BlockSpec((C_in_max, L), lambda n: (0, 0)),
    ] + [pl.BlockSpec(w.shape, lambda n: (0, 0)) for w in w_list]

    out = pl.pallas_call(
        kernel,
        out_shape=jax.ShapeDtypeStruct((N, C_out, HW), jnp.float32),
        grid_spec=pltpu.PrefetchScalarGridSpec(
            num_scalar_prefetch=0,
            grid=(N,),
            in_specs=in_specs,
            out_specs=pl.BlockSpec((1, C_out, HW), lambda n: (n, 0, 0)),
            scratch_shapes=[
                pltpu.VMEM((C0 + L * growth, HW), jnp.float32),          # feature buffer
                pltpu.VMEM((C_in_max, HW + 2 * (W + 1)), jnp.float32),   # activation staging
                pltpu.VMEM((9 * C_in_max, HW), jnp.float32),             # im2col
            ],
        ),
        compiler_params=pltpu.CompilerParams(
            dimension_semantics=("parallel",)),
    )(x_flat, masks, scale_pack, shift_pack, *w_list)

    return out.reshape(N, C_out, H, W)


# ----------------------------- reference (pure JAX) ----------------------------- #

def _ref_dense_layer(x_nhwc, scale, shift, w):
    a = jnp.maximum(x_nhwc * scale.reshape(1, 1, 1, -1) + shift.reshape(1, 1, 1, -1), 0.0)
    return lax.conv_general_dilated(
        a, w, window_strides=(1, 1), padding="SAME",
        dimension_numbers=("NHWC", "HWIO", "NHWC"))


def _ref_dense_block(x_nchw, layer_params, residual=False):
    x = jnp.transpose(x_nchw, (0, 2, 3, 1))
    feats = [x] if residual else []
    for (scale, shift, w) in layer_params:
        out = _ref_dense_layer(x, scale, shift, w)
        x = jnp.concatenate([x, out], axis=-1)
        feats.append(out)
    return jnp.transpose(jnp.concatenate(feats, axis=-1), (0, 3, 1, 2))


# ----------------------------- parameter init ----------------------------- #

def init_dense_block_params(key, in_channels, growth_rate, num_layers, eps=1e-5):
    """Deterministic synthetic params. Returns list of (scale, shift, conv_w_HWIO)."""
    params = []
    for i in range(num_layers):
        cin = in_channels + i * growth_rate
        cout = growth_rate
        key, k1, k2, k3, k4, k5 = jax.random.split(key, 6)
        gamma = 1.0 + 0.1 * jax.random.normal(k1, (cin,), jnp.float32)
        beta = 0.1 * jax.random.normal(k2, (cin,), jnp.float32)
        running_mean = 0.1 * jax.random.normal(k3, (cin,), jnp.float32)
        running_var = 0.5 + jnp.abs(jax.random.normal(k4, (cin,), jnp.float32))
        scale = gamma / jnp.sqrt(running_var + eps)
        shift = beta - running_mean * scale
        # PyTorch conv weight layout is (Cout, Cin, 3, 3); kernel wants HWIO (3,3,Cin,Cout).
        w_oihw = 0.1 * jax.random.normal(k5, (cout, cin, 3, 3), jnp.float32)
        w_hwio = jnp.transpose(w_oihw, (2, 3, 1, 0))
        params.append((scale, shift, w_hwio))
    return params


if __name__ == "__main__":
    key = jax.random.PRNGKey(0)
    batch, in_channels, growth_rate, num_layers = 2, 4, 4, 3
    H = W = 16
    residual = False

    kx, kp = jax.random.split(key)
    x = jax.random.normal(kx, (batch, in_channels, H, W), jnp.float32)  # NCHW
    params = init_dense_block_params(kp, in_channels, growth_rate, num_layers)

    out = jax.block_until_ready(dense_block_pallas(x, params, residual=residual))

    expected_channels = (in_channels if residual else 0) + num_layers * growth_rate
    assert out.shape == (batch, expected_channels, H, W), out.shape

    ref = jax.block_until_ready(_ref_dense_block(x, params, residual=residual))
    assert jnp.allclose(out, ref, atol=1e-3, rtol=1e-3), \
        f"max abs err {jnp.max(jnp.abs(out - ref))}"

    print("KERNEL_OK")
</pallas_src>

<mosaic_0001>
module attributes {stable_mosaic.version = 11 : i64} {
  func.func @_dense_block_kernel(%arg0: i32, %arg1: memref<1x4x256xf32, #tpu.memory_space<vmem>>, %arg2: memref<9x256xf32, #tpu.memory_space<vmem>>, %arg3: memref<12x3xf32, #tpu.memory_space<vmem>>, %arg4: memref<12x3xf32, #tpu.memory_space<vmem>>, %arg5: memref<4x36xf32, #tpu.memory_space<vmem>>, %arg6: memref<4x72xf32, #tpu.memory_space<vmem>>, %arg7: memref<4x108xf32, #tpu.memory_space<vmem>>, %arg8: memref<1x12x256xf32, #tpu.memory_space<vmem>>, %arg9: memref<16x256xf32, #tpu.memory_space<vmem>>, %arg10: memref<12x290xf32, #tpu.memory_space<vmem>>, %arg11: memref<108x256xf32, #tpu.memory_space<vmem>>) attributes {dimension_semantics = [#tpu.dimension_semantics<parallel>], iteration_bounds = array<i64: 2>, scalar_prefetch = 0 : i64, scratch_operands = 3 : i64, tpu.core_type = #tpu.core_type<tc>, window_params = [{transform_indices = @transform_0, window_bounds = array<i64: 1, 4, 256>}, {pipeline_mode = #tpu.pipeline_mode<synchronous>, transform_indices = @transform_1, window_bounds = array<i64: 9, 256>}, {pipeline_mode = #tpu.pipeline_mode<synchronous>, transform_indices = @transform_2, window_bounds = array<i64: 12, 3>}, {pipeline_mode = #tpu.pipeline_mode<synchronous>, transform_indices = @transform_3, window_bounds = array<i64: 12, 3>}, {pipeline_mode = #tpu.pipeline_mode<synchronous>, transform_indices = @transform_4, window_bounds = array<i64: 4, 36>}, {pipeline_mode = #tpu.pipeline_mode<synchronous>, transform_indices = @transform_5, window_bounds = array<i64: 4, 72>}, {pipeline_mode = #tpu.pipeline_mode<synchronous>, transform_indices = @transform_6, window_bounds = array<i64: 4, 108>}, {transform_indices = @transform_7, window_bounds = array<i64: 1, 12, 256>}]} {
    %cst = arith.constant 0.000000e+00 : f32
    %0 = vector.broadcast %cst : f32 to vector<12x290xf32>
    %c0 = arith.constant 0 : index
    %c0_0 = arith.constant 0 : index
    %1 = vector.load %arg10[%c0, %c0_0] : memref<12x290xf32, #tpu.memory_space<vmem>>, vector<12x290xf32>
    tpu.vector_store %arg10[%c0, %c0_0], %0 {strides = array<i32>} : memref<12x290xf32, #tpu.memory_space<vmem>>, vector<12x290xf32>,
    %c0_1 = arith.constant 0 : index
    %c0_2 = arith.constant 0 : index
    %c0_3 = arith.constant 0 : index
    %2 = vector.load %arg1[%c0_1, %c0_2, %c0_3] : memref<1x4x256xf32, #tpu.memory_space<vmem>>, vector<1x4x256xf32>
    %3 = vector.shape_cast %2 : vector<1x4x256xf32> to vector<4x256xf32>
    %c0_4 = arith.constant 0 : index
    %c0_5 = arith.constant 0 : index
    %4 = vector.load %arg9[%c0_4, %c0_5] : memref<16x256xf32, #tpu.memory_space<vmem>>, vector<4x256xf32>
    tpu.vector_store %arg9[%c0_4, %c0_5], %3 {strides = array<i32>} : memref<16x256xf32, #tpu.memory_space<vmem>>, vector<4x256xf32>,
    %c0_6 = arith.constant 0 : index
    %c0_7 = arith.constant 0 : index
    %5 = vector.load %arg9[%c0_6, %c0_7] : memref<16x256xf32, #tpu.memory_space<vmem>>, vector<4x256xf32>
    %c0_8 = arith.constant 0 : index
    %c0_9 = arith.constant 0 : index
    %6 = vector.load %arg3[%c0_8, %c0_9] : memref<12x3xf32, #tpu.memory_space<vmem>>, vector<4x1xf32>
    %c0_10 = arith.constant 0 : index
    %c0_11 = arith.constant 0 : index
    %7 = vector.load %arg4[%c0_10, %c0_11] : memref<12x3xf32, #tpu.memory_space<vmem>>, vector<4x1xf32>
    %8 = vector.broadcast %6 : vector<4x1xf32> to vector<4x256xf32>
    %9 = arith.mulf %5, %8 : vector<4x256xf32>
    %10 = vector.broadcast %7 : vector<4x1xf32> to vector<4x256xf32>
    %11 = arith.addf %9, %10 : vector<4x256xf32>
    %cst_12 = arith.constant 0.000000e+00 : f32
    %12 = vector.broadcast %cst_12 : f32 to vector<4x256xf32>
    %13 = arith.maximumf %11, %12 : vector<4x256xf32>
    %c0_13 = arith.constant 0 : index
    %c17 = arith.constant 17 : index
    %14 = vector.load %arg10[%c0_13, %c17] : memref<12x290xf32, #tpu.memory_space<vmem>>, vector<4x256xf32>
    tpu.vector_store %arg10[%c0_13, %c17], %13 {strides = array<i32>} : memref<12x290xf32, #tpu.memory_space<vmem>>, vector<4x256xf32>,
    %c0_14 = arith.constant 0 : index
    %c0_15 = arith.constant 0 : index
    %15 = vector.load %arg10[%c0_14, %c0_15] : memref<12x290xf32, #tpu.memory_space<vmem>>, vector<4x256xf32>
    %c0_16 = arith.constant 0 : index
    %c0_17 = arith.constant 0 : index
    %16 = vector.load %arg2[%c0_16, %c0_17] : memref<9x256xf32, #tpu.memory_space<vmem>>, vector<1x256xf32>
    %17 = vector.broadcast %16 : vector<1x256xf32> to vector<4x256xf32>
    %18 = arith.mulf %15, %17 : vector<4x256xf32>
    %c0_18 = arith.constant 0 : index
    %c0_19 = arith.constant 0 : index
    %19 = vector.load %arg11[%c0_18, %c0_19] : memref<108x256xf32, #tpu.memory_space<vmem>>, vector<4x256xf32>
    tpu.vector_store %arg11[%c0_18, %c0_19], %18 {strides = array<i32>} : memref<108x256xf32, #tpu.memory_space<vmem>>, vector<4x256xf32>,
    %c0_20 = arith.constant 0 : index
    %c1 = arith.constant 1 : index
    %20 = vector.load %arg10[%c0_20, %c1] : memref<12x290xf32, #tpu.memory_space<vmem>>, vector<4x256xf32>
    %c1_21 = arith.constant 1 : index
    %c0_22 = arith.constant 0 : index
    %21 = vector.load %arg2[%c1_21, %c0_22] : memref<9x256xf32, #tpu.memory_space<vmem>>, vector<1x256xf32>
    %22 = vector.broadcast %21 : vector<1x256xf32> to vector<4x256xf32>
    %23 = arith.mulf %20, %22 : vector<4x256xf32>
    %c4 = arith.constant 4 : index
    %c0_23 = arith.constant 0 : index
    %24 = vector.load %arg11[%c4, %c0_23] : memref<108x256xf32, #tpu.memory_space<vmem>>, vector<4x256xf32>
    tpu.vector_store %arg11[%c4, %c0_23], %23 {strides = array<i32>} : memref<108x256xf32, #tpu.memory_space<vmem>>, vector<4x256xf32>,
    %c0_24 = arith.constant 0 : index
    %c2 = arith.constant 2 : index
    %25 = vector.load %arg10[%c0_24, %c2] : memref<12x290xf32, #tpu.memory_space<vmem>>, vector<4x256xf32>
    %c2_25 = arith.constant 2 : index
    %c0_26 = arith.constant 0 : index
    %26 = vector.load %arg2[%c2_25, %c0_26] : memref<9x256xf32, #tpu.memory_space<vmem>>, vector<1x256xf32>
    %27 = vector.broadcast %26 : vector<1x256xf32> to vector<4x256xf32>
    %28 = arith.mulf %25, %27 : vector<4x256xf32>
    %c8 = arith.constant 8 : index
    %c0_27 = arith.constant 0 : index
    %29 = vector.load %arg11[%c8, %c0_27] : memref<108x256xf32, #tpu.memory_space<vmem>>, vector<4x256xf32>
    tpu.vector_store %arg11[%c8, %c0_27], %28 {strides = array<i32>} : memref<108x256xf32, #tpu.memory_space<vmem>>, vector<4x256xf32>,
    %c0_28 = arith.constant 0 : index
    %c16 = arith.constant 16 : index
    %30 = vector.load %arg10[%c0_28, %c16] : memref<12x290xf32, #tpu.memory_space<vmem>>, vector<4x256xf32>
    %c3 = arith.constant 3 : index
    %c0_29 = arith.constant 0 : index
    %31 = vector.load %arg2[%c3, %c0_29] : memref<9x256xf32, #tpu.memory_space<vmem>>, vector<1x256xf32>
    %32 = vector.broadcast %31 : vector<1x256xf32> to vector<4x256xf32>
    %33 = arith.mulf %30, %32 : vector<4x256xf32>
    %c12 = arith.constant 12 : index
    %c0_30 = arith.constant 0 : index
    %34 = vector.load %arg11[%c12, %c0_30] : memref<108x256xf32, #tpu.memory_space<vmem>>, vector<4x256xf32>
    tpu.vector_store %arg11[%c12, %c0_30], %33 {strides = array<i32>} : memref<108x256xf32, #tpu.memory_space<vmem>>, vector<4x256xf32>,
    %c0_31 = arith.constant 0 : index
    %c17_32 = arith.constant 17 : index
    %35 = vector.load %arg10[%c0_31, %c17_32] : memref<12x290xf32, #tpu.memory_space<vmem>>, vector<4x256xf32>
    %c4_33 = arith.constant 4 : index
    %c0_34 = arith.constant 0 : index
    %36 = vector.load %arg2[%c4_33, %c0_34] : memref<9x256xf32, #tpu.memory_space<vmem>>, vector<1x256xf32>
    %37 = vector.broadcast %36 : vector<1x256xf32> to vector<4x256xf32>
    %38 = arith.mulf %35, %37 : vector<4x256xf32>
    %c16_35 = arith.constant 16 : index
    %c0_36 = arith.constant 0 : index
    %39 = vector.load %arg11[%c16_35, %c0_36] : memref<108x256xf32, #tpu.memory_space<vmem>>, vector<4x256xf32>
    tpu.vector_store %arg11[%c16_35, %c0_36], %38 {strides = array<i32>} : memref<108x256xf32, #tpu.memory_space<vmem>>, vector<4x256xf32>,
    %c0_37 = arith.constant 0 : index
    %c18 = arith.constant 18 : index
    %40 = vector.load %arg10[%c0_37, %c18] : memref<12x290xf32, #tpu.memory_space<vmem>>, vector<4x256xf32>
    %c5 = arith.constant 5 : index
    %c0_38 = arith.constant 0 : index
    %41 = vector.load %arg2[%c5, %c0_38] : memref<9x256xf32, #tpu.memory_space<vmem>>, vector<1x256xf32>
    %42 = vector.broadcast %41 : vector<1x256xf32> to vector<4x256xf32>
    %43 = arith.mulf %40, %42 : vector<4x256xf32>
    %c20 = arith.constant 20 : index
    %c0_39 = arith.constant 0 : index
    %44 = vector.load %arg11[%c20, %c0_39] : memref<108x256xf32, #tpu.memory_space<vmem>>, vector<4x256xf32>
    tpu.vector_store %arg11[%c20, %c0_39], %43 {strides = array<i32>} : memref<108x256xf32, #tpu.memory_space<vmem>>, vector<4x256xf32>,
    %c0_40 = arith.constant 0 : index
    %c32 = arith.constant 32 : index
    %45 = vector.load %arg10[%c0_40, %c32] : memref<12x290xf32, #tpu.memory_space<vmem>>, vector<4x256xf32>
    %c6 = arith.constant 6 : index
    %c0_41 = arith.constant 0 : index
    %46 = vector.load %arg2[%c6, %c0_41] : memref<9x256xf32, #tpu.memory_space<vmem>>, vector<1x256xf32>
    %47 = vector.broadcast %46 : vector<1x256xf32> to vector<4x256xf32>
    %48 = arith.mulf %45, %47 : vector<4x256xf32>
    %c24 = arith.constant 24 : index
    %c0_42 = arith.constant 0 : index
    %49 = vector.load %arg11[%c24, %c0_42] : memref<108x256xf32, #tpu.memory_space<vmem>>, vector<4x256xf32>
    tpu.vector_store %arg11[%c24, %c0_42], %48 {strides = array<i32>} : memref<108x256xf32, #tpu.memory_space<vmem>>, vector<4x256xf32>,
    %c0_43 = arith.constant 0 : index
    %c33 = arith.constant 33 : index
    %50 = vector.load %arg10[%c0_43, %c33] : memref<12x290xf32, #tpu.memory_space<vmem>>, vector<4x256xf32>
    %c7 = arith.constant 7 : index
    %c0_44 = arith.constant 0 : index
    %51 = vector.load %arg2[%c7, %c0_44] : memref<9x256xf32, #tpu.memory_space<vmem>>, vector<1x256xf32>
    %52 = vector.broadcast %51 : vector<1x256xf32> to vector<4x256xf32>
    %53 = arith.mulf %50, %52 : vector<4x256xf32>
    %c28 = arith.constant 28 : index
    %c0_45 = arith.constant 0 : index
    %54 = vector.load %arg11[%c28, %c0_45] : memref<108x256xf32, #tpu.memory_space<vmem>>, vector<4x256xf32>
    tpu.vector_store %arg11[%c28, %c0_45], %53 {strides = array<i32>} : memref<108x256xf32, #tpu.memory_space<vmem>>, vector<4x256xf32>,
    %c0_46 = arith.constant 0 : index
    %c34 = arith.constant 34 : index
    %55 = vector.load %arg10[%c0_46, %c34] : memref<12x290xf32, #tpu.memory_space<vmem>>, vector<4x256xf32>
    %c8_47 = arith.constant 8 : index
    %c0_48 = arith.constant 0 : index
    %56 = vector.load %arg2[%c8_47, %c0_48] : memref<9x256xf32, #tpu.memory_space<vmem>>, vector<1x256xf32>
    %57 = vector.broadcast %56 : vector<1x256xf32> to vector<4x256xf32>
    %58 = arith.mulf %55, %57 : vector<4x256xf32>
    %c32_49 = arith.constant 32 : index
    %c0_50 = arith.constant 0 : index
    %59 = vector.load %arg11[%c32_49, %c0_50] : memref<108x256xf32, #tpu.memory_space<vmem>>, vector<4x256xf32>
    tpu.vector_store %arg11[%c32_49, %c0_50], %58 {strides = array<i32>} : memref<108x256xf32, #tpu.memory_space<vmem>>, vector<4x256xf32>,
    %c0_51 = arith.constant 0 : index
    %c0_52 = arith.constant 0 : index
    %60 = vector.load %arg5[%c0_51, %c0_52] : memref<4x36xf32, #tpu.memory_space<vmem>>, vector<4x36xf32>
    %c0_53 = arith.constant 0 : index
    %c0_54 = arith.constant 0 : index
    %61 = vector.load %arg11[%c0_53, %c0_54] : memref<108x256xf32, #tpu.memory_space<vmem>>, vector<36x256xf32>
    %cst_55 = arith.constant dense<0.000000e+00> : vector<4x256xf32>
    %62 = tpu.matmul %60, %61, %cst_55 {dimension_numbers = #tpu.dot_dimension_numbers<[1], [0], [0], [1], [0, 0, 1, 1], [], []>} : vector<4x36xf32>, vector<36x256xf32>, vector<4x256xf32> -> vector<4x256xf32>
    %c4_56 = arith.constant 4 : index
    %c0_57 = arith.constant 0 : index
    %63 = vector.load %arg9[%c4_56, %c0_57] : memref<16x256xf32, #tpu.memory_space<vmem>>, vector<4x256xf32>
    tpu.vector_store %arg9[%c4_56, %c0_57], %62 {strides = array<i32>} : memref<16x256xf32, #tpu.memory_space<vmem>>, vector<4x256xf32>,
    %c0_58 = arith.constant 0 : index
    %c0_59 = arith.constant 0 : index
    %c0_60 = arith.constant 0 : index
    %64 = vector.load %arg8[%c0_58, %c0_59, %c0_60] : memref<1x12x256xf32, #tpu.memory_space<vmem>>, vector<1x4x256xf32>
    %65 = vector.shape_cast %64 : vector<1x4x256xf32> to vector<4x256xf32>
    %66 = vector.shape_cast %62 : vector<4x256xf32> to vector<1x4x256xf32>
    tpu.vector_store %arg8[%c0_58, %c0_59, %c0_60], %66 {strides = array<i32>} : memref<1x12x256xf32, #tpu.memory_space<vmem>>, vector<1x4x256xf32>,
    %c0_61 = arith.constant 0 : index
    %c0_62 = arith.constant 0 : index
    %67 = vector.load %arg9[%c0_61, %c0_62] : memref<16x256xf32, #tpu.memory_space<vmem>>, vector<8x256xf32>
    %c0_63 = arith.constant 0 : index
    %c1_64 = arith.constant 1 : index
    %68 = vector.load %arg3[%c0_63, %c1_64] : memref<12x3xf32, #tpu.memory_space<vmem>>, vector<8x1xf32>
    %c0_65 = arith.constant 0 : index
    %c1_66 = arith.constant 1 : index
    %69 = vector.load %arg4[%c0_65, %c1_66] : memref<12x3xf32, #tpu.memory_space<vmem>>, vector<8x1xf32>
    %70 = vector.broadcast %68 : vector<8x1xf32> to vector<8x256xf32>
    %71 = arith.mulf %67, %70 : vector<8x256xf32>
    %72 = vector.broadcast %69 : vector<8x1xf32> to vector<8x256xf32>
    %73 = arith.addf %71, %72 : vector<8x256xf32>
    %cst_67 = arith.constant 0.000000e+00 : f32
    %74 = vector.broadcast %cst_67 : f32 to vector<8x256xf32>
    %75 = arith.maximumf %73, %74 : vector<8x256xf32>
    %c0_68 = arith.constant 0 : index
    %c17_69 = arith.constant 17 : index
    %76 = vector.load %arg10[%c0_68, %c17_69] : memref<12x290xf32, #tpu.memory_space<vmem>>, vector<8x256xf32>
    tpu.vector_store %arg10[%c0_68, %c17_69], %75 {strides = array<i32>} : memref<12x290xf32, #tpu.memory_space<vmem>>, vector<8x256xf32>,
    %c0_70 = arith.constant 0 : index
    %c0_71 = arith.constant 0 : index
    %77 = vector.load %arg10[%c0_70, %c0_71] : memref<12x290xf32, #tpu.memory_space<vmem>>, vector<8x256xf32>
    %c0_72 = arith.constant 0 : index
    %c0_73 = arith.constant 0 : index
    %78 = vector.load %arg2[%c0_72, %c0_73] : memref<9x256xf32, #tpu.memory_space<vmem>>, vector<1x256xf32>
    %79 = vector.broadcast %78 : vector<1x256xf32> to vector<8x256xf32>
    %80 = arith.mulf %77, %79 : vector<8x256xf32>
    %c0_74 = arith.constant 0 : index
    %c0_75 = arith.constant 0 : index
    %81 = vector.load %arg11[%c0_74, %c0_75] : memref<108x256xf32, #tpu.memory_space<vmem>>, vector<8x256xf32>
    tpu.vector_store %arg11[%c0_74, %c0_75], %80 {strides = array<i32>} : memref<108x256xf32, #tpu.memory_space<vmem>>, vector<8x256xf32>,
    %c0_76 = arith.constant 0 : index
    %c1_77 = arith.constant 1 : index
    %82 = vector.load %arg10[%c0_76, %c1_77] : memref<12x290xf32, #tpu.memory_space<vmem>>, vector<8x256xf32>
    %c1_78 = arith.constant 1 : index
    %c0_79 = arith.constant 0 : index
    %83 = vector.load %arg2[%c1_78, %c0_79] : memref<9x256xf32, #tpu.memory_space<vmem>>, vector<1x256xf32>
    %84 = vector.broadcast %83 : vector<1x256xf32> to vector<8x256xf32>
    %85 = arith.mulf %82, %84 : vector<8x256xf32>
    %c8_80 = arith.constant 8 : index
    %c0_81 = arith.constant 0 : index
    %86 = vector.load %arg11[%c8_80, %c0_81] : memref<108x256xf32, #tpu.memory_space<vmem>>, vector<8x256xf32>
    tpu.vector_store %arg11[%c8_80, %c0_81], %85 {strides = array<i32>} : memref<108x256xf32, #tpu.memory_space<vmem>>, vector<8x256xf32>,
    %c0_82 = arith.constant 0 : index
    %c2_83 = arith.constant 2 : index
    %87 = vector.load %arg10[%c0_82, %c2_83] : memref<12x290xf32, #tpu.memory_space<vmem>>, vector<8x256xf32>
    %c2_84 = arith.constant 2 : index
    %c0_85 = arith.constant 0 : index
    %88 = vector.load %arg2[%c2_84, %c0_85] : memref<9x256xf32, #tpu.memory_space<vmem>>, vector<1x256xf32>
    %89 = vector.broadcast %88 : vector<1x256xf32> to vector<8x256xf32>
    %90 = arith.mulf %87, %89 : vector<8x256xf32>
    %c16_86 = arith.constant 16 : index
    %c0_87 = arith.constant 0 : index
    %91 = vector.load %arg11[%c16_86, %c0_87] : memref<108x256xf32, #tpu.memory_space<vmem>>, vector<8x256xf32>
    tpu.vector_store %arg11[%c16_86, %c0_87], %90 {strides = array<i32>} : memref<108x256xf32, #tpu.memory_space<vmem>>, vector<8x256xf32>,
    %c0_88 = arith.constant 0 : index
    %c16_89 = arith.constant 16 : index
    %92 = vector.load %arg10[%c0_88, %c16_89] : memref<12x290xf32, #tpu.memory_space<vmem>>, vector<8x256xf32>
    %c3_90 = arith.constant 3 : index
    %c0_91 = arith.constant 0 : index
    %93 = vector.load %arg2[%c3_90, %c0_91] : memref<9x256xf32, #tpu.memory_space<vmem>>, vector<1x256xf32>
    %94 = vector.broadcast %93 : vector<1x256xf32> to vector<8x256xf32>
    %95 = arith.mulf %92, %94 : vector<8x256xf32>
    %c24_92 = arith.constant 24 : index
    %c0_93 = arith.constant 0 : index
    %96 = vector.load %arg11[%c24_92, %c0_93] : memref<108x256xf32, #tpu.memory_space<vmem>>, vector<8x256xf32>
    tpu.vector_store %arg11[%c24_92, %c0_93], %95 {strides = array<i32>} : memref<108x256xf32, #tpu.memory_space<vmem>>, vector<8x256xf32>,
    %c0_94 = arith.constant 0 : index
    %c17_95 = arith.constant 17 : index
    %97 = vector.load %arg10[%c0_94, %c17_95] : memref<12x290xf32, #tpu.memory_space<vmem>>, vector<8x256xf32>
    %c4_96 = arith.constant 4 : index
    %c0_97 = arith.constant 0 : index
    %98 = vector.load %arg2[%c4_96, %c0_97] : memref<9x256xf32, #tpu.memory_space<vmem>>, vector<1x256xf32>
    %99 = vector.broadcast %98 : vector<1x256xf32> to vector<8x256xf32>
    %100 = arith.mulf %97, %99 : vector<8x256xf32>
    %c32_98 = arith.constant 32 : index
    %c0_99 = arith.constant 0 : index
    %101 = vector.load %arg11[%c32_98, %c0_99] : memref<108x256xf32, #tpu.memory_space<vmem>>, vector<8x256xf32>
    tpu.vector_store %arg11[%c32_98, %c0_99], %100 {strides = array<i32>} : memref<108x256xf32, #tpu.memory_space<vmem>>, vector<8x256xf32>,
    %c0_100 = arith.constant 0 : index
    %c18_101 = arith.constant 18 : index
    %102 = vector.load %arg10[%c0_100, %c18_101] : memref<12x290xf32, #tpu.memory_space<vmem>>, vector<8x256xf32>
    %c5_102 = arith.constant 5 : index
    %c0_103 = arith.constant 0 : index
    %103 = vector.load %arg2[%c5_102, %c0_103] : memref<9x256xf32, #tpu.memory_space<vmem>>, vector<1x256xf32>
    %104 = vector.broadcast %103 : vector<1x256xf32> to vector<8x256xf32>
    %105 = arith.mulf %102, %104 : vector<8x256xf32>
    %c40 = arith.constant 40 : index
    %c0_104 = arith.constant 0 : index
    %106 = vector.load %arg11[%c40, %c0_104] : memref<108x256xf32, #tpu.memory_space<vmem>>, vector<8x256xf32>
    tpu.vector_store %arg11[%c40, %c0_104], %105 {strides = array<i32>} : memref<108x256xf32, #tpu.memory_space<vmem>>, vector<8x256xf32>,
    %c0_105 = arith.constant 0 : index
    %c32_106 = arith.constant 32 : index
    %107 = vector.load %arg10[%c0_105, %c32_106] : memref<12x290xf32, #tpu.memory_space<vmem>>, vector<8x256xf32>
    %c6_107 = arith.constant 6 : index
    %c0_108 = arith.constant 0 : index
    %108 = vector.load %arg2[%c6_107, %c0_108] : memref<9x256xf32, #tpu.memory_space<vmem>>, vector<1x256xf32>
    %109 = vector.broadcast %108 : vector<1x256xf32> to vector<8x256xf32>
    %110 = arith.mulf %107, %109 : vector<8x256xf32>
    %c48 = arith.constant 48 : index
    %c0_109 = arith.constant 0 : index
    %111 = vector.load %arg11[%c48, %c0_109] : memref<108x256xf32, #tpu.memory_space<vmem>>, vector<8x256xf32>
    tpu.vector_store %arg11[%c48, %c0_109], %110 {strides = array<i32>} : memref<108x256xf32, #tpu.memory_space<vmem>>, vector<8x256xf32>,
    %c0_110 = arith.constant 0 : index
    %c33_111 = arith.constant 33 : index
    %112 = vector.load %arg10[%c0_110, %c33_111] : memref<12x290xf32, #tpu.memory_space<vmem>>, vector<8x256xf32>
    %c7_112 = arith.constant 7 : index
    %c0_113 = arith.constant 0 : index
    %113 = vector.load %arg2[%c7_112, %c0_113] : memref<9x256xf32, #tpu.memory_space<vmem>>, vector<1x256xf32>
    %114 = vector.broadcast %113 : vector<1x256xf32> to vector<8x256xf32>
    %115 = arith.mulf %112, %114 : vector<8x256xf32>
    %c56 = arith.constant 56 : index
    %c0_114 = arith.constant 0 : index
    %116 = vector.load %arg11[%c56, %c0_114] : memref<108x256xf32, #tpu.memory_space<vmem>>, vector<8x256xf32>
    tpu.vector_store %arg11[%c56, %c0_114], %115 {strides = array<i32>} : memref<108x256xf32, #tpu.memory_space<vmem>>, vector<8x256xf32>,
    %c0_115 = arith.constant 0 : index
    %c34_116 = arith.constant 34 : index
    %117 = vector.load %arg10[%c0_115, %c34_116] : memref<12x290xf32, #tpu.memory_space<vmem>>, vector<8x256xf32>
    %c8_117 = arith.constant 8 : index
    %c0_118 = arith.constant 0 : index
    %118 = vector.load %arg2[%c8_117, %c0_118] : memref<9x256xf32, #tpu.memory_space<vmem>>, vector<1x256xf32>
    %119 = vector.broadcast %118 : vector<1x256xf32> to vector<8x256xf32>
    %120 = arith.mulf %117, %119 : vector<8x256xf32>
    %c64 = arith.constant 64 : index
    %c0_119 = arith.constant 0 : index
    %121 = vector.load %arg11[%c64, %c0_119] : memref<108x256xf32, #tpu.memory_space<vmem>>, vector<8x256xf32>
    tpu.vector_store %arg11[%c64, %c0_119], %120 {strides = array<i32>} : memref<108x256xf32, #tpu.memory_space<vmem>>, vector<8x256xf32>,
    %c0_120 = arith.constant 0 : index
    %c0_121 = arith.constant 0 : index
    %122 = vector.load %arg6[%c0_120, %c0_121] : memref<4x72xf32, #tpu.memory_space<vmem>>, vector<4x72xf32>
    %c0_122 = arith.constant 0 : index
    %c0_123 = arith.constant 0 : index
    %123 = vector.load %arg11[%c0_122, %c0_123] : memref<108x256xf32, #tpu.memory_space<vmem>>, vector<72x256xf32>
    %cst_124 = arith.constant dense<0.000000e+00> : vector<4x256xf32>
    %124 = tpu.matmul %122, %123, %cst_124 {dimension_numbers = #tpu.dot_dimension_numbers<[1], [0], [0], [1], [0, 0, 1, 1], [], []>} : vector<4x72xf32>, vector<72x256xf32>, vector<4x256xf32> -> vector<4x256xf32>
    %c8_125 = arith.constant 8 : index
    %c0_126 = arith.constant 0 : index
    %125 = vector.load %arg9[%c8_125, %c0_126] : memref<16x256xf32, #tpu.memory_space<vmem>>, vector<4x256xf32>
    tpu.vector_store %arg9[%c8_125, %c0_126], %124 {strides = array<i32>} : memref<16x256xf32, #tpu.memory_space<vmem>>, vector<4x256xf32>,
    %c0_127 = arith.constant 0 : index
    %c4_128 = arith.constant 4 : index
    %c0_129 = arith.constant 0 : index
    %126 = vector.load %arg8[%c0_127, %c4_128, %c0_129] : memref<1x12x256xf32, #tpu.memory_space<vmem>>, vector<1x4x256xf32>
    %127 = vector.shape_cast %126 : vector<1x4x256xf32> to vector<4x256xf32>
    %128 = vector.shape_cast %124 : vector<4x256xf32> to vector<1x4x256xf32>
    tpu.vector_store %arg8[%c0_127, %c4_128, %c0_129], %128 {strides = array<i32>} : memref<1x12x256xf32, #tpu.memory_space<vmem>>, vector<1x4x256xf32>,
    %c0_130 = arith.constant 0 : index
    %c0_131 = arith.constant 0 : index
    %129 = vector.load %arg9[%c0_130, %c0_131] : memref<16x256xf32, #tpu.memory_space<vmem>>, vector<12x256xf32>
    %c0_132 = arith.constant 0 : index
    %c2_133 = arith.constant 2 : index
    %130 = vector.load %arg3[%c0_132, %c2_133] : memref<12x3xf32, #tpu.memory_space<vmem>>, vector<12x1xf32>
    %c0_134 = arith.constant 0 : index
    %c2_135 = arith.constant 2 : index
    %131 = vector.load %arg4[%c0_134, %c2_135] : memref<12x3xf32, #tpu.memory_space<vmem>>, vector<12x1xf32>
    %132 = vector.broadcast %130 : vector<12x1xf32> to vector<12x256xf32>
    %133 = arith.mulf %129, %132 : vector<12x256xf32>
    %134 = vector.broadcast %131 : vector<12x1xf32> to vector<12x256xf32>
    %135 = arith.addf %133, %134 : vector<12x256xf32>
    %cst_136 = arith.constant 0.000000e+00 : f32
    %136 = vector.broadcast %cst_136 : f32 to vector<12x256xf32>
    %137 = arith.maximumf %135, %136 : vector<12x256xf32>
    %c0_137 = arith.constant 0 : index
    %c17_138 = arith.constant 17 : index
    %138 = vector.load %arg10[%c0_137, %c17_138] : memref<12x290xf32, #tpu.memory_space<vmem>>, vector<12x256xf32>
    tpu.vector_store %arg10[%c0_137, %c17_138], %137 {strides = array<i32>} : memref<12x290xf32, #tpu.memory_space<vmem>>, vector<12x256xf32>,
    %c0_139 = arith.constant 0 : index
    %c0_140 = arith.constant 0 : index
    %139 = vector.load %arg10[%c0_139, %c0_140] : memref<12x290xf32, #tpu.memory_space<vmem>>, vector<12x256xf32>
    %c0_141 = arith.constant 0 : index
    %c0_142 = arith.constant 0 : index
    %140 = vector.load %arg2[%c0_141, %c0_142] : memref<9x256xf32, #tpu.memory_space<vmem>>, vector<1x256xf32>
    %141 = vector.broadcast %140 : vector<1x256xf32> to vector<12x256xf32>
    %142 = arith.mulf %139, %141 : vector<12x256xf32>
    %c0_143 = arith.constant 0 : index
    %c0_144 = arith.constant 0 : index
    %143 = vector.load %arg11[%c0_143, %c0_144] : memref<108x256xf32, #tpu.memory_space<vmem>>, vector<12x256xf32>
    tpu.vector_store %arg11[%c0_143, %c0_144], %142 {strides = array<i32>} : memref<108x256xf32, #tpu.memory_space<vmem>>, vector<12x256xf32>,
    %c0_145 = arith.constant 0 : index
    %c1_146 = arith.constant 1 : index
    %144 = vector.load %arg10[%c0_145, %c1_146] : memref<12x290xf32, #tpu.memory_space<vmem>>, vector<12x256xf32>
    %c1_147 = arith.constant 1 : index
    %c0_148 = arith.constant 0 : index
    %145 = vector.load %arg2[%c1_147, %c0_148] : memref<9x256xf32, #tpu.memory_space<vmem>>, vector<1x256xf32>
    %146 = vector.broadcast %145 : vector<1x256xf32> to vector<12x256xf32>
    %147 = arith.mulf %144, %146 : vector<12x256xf32>
    %c12_149 = arith.constant 12 : index
    %c0_150 = arith.constant 0 : index
    %148 = vector.load %arg11[%c12_149, %c0_150] : memref<108x256xf32, #tpu.memory_space<vmem>>, vector<12x256xf32>
    tpu.vector_store %arg11[%c12_149, %c0_150], %147 {strides = array<i32>} : memref<108x256xf32, #tpu.memory_space<vmem>>, vector<12x256xf32>,
    %c0_151 = arith.constant 0 : index
    %c2_152 = arith.constant 2 : index
    %149 = vector.load %arg10[%c0_151, %c2_152] : memref<12x290xf32, #tpu.memory_space<vmem>>, vector<12x256xf32>
    %c2_153 = arith.constant 2 : index
    %c0_154 = arith.constant 0 : index
    %150 = vector.load %arg2[%c2_153, %c0_154] : memref<9x256xf32, #tpu.memory_space<vmem>>, vector<1x256xf32>
    %151 = vector.broadcast %150 : vector<1x256xf32> to vector<12x256xf32>
    %152 = arith.mulf %149, %151 : vector<12x256xf32>
    %c24_155 = arith.constant 24 : index
    %c0_156 = arith.constant 0 : index
    %153 = vector.load %arg11[%c24_155, %c0_156] : memref<108x256xf32, #tpu.memory_space<vmem>>, vector<12x256xf32>
    tpu.vector_store %arg11[%c24_155, %c0_156], %152 {strides = array<i32>} : memref<108x256xf32, #tpu.memory_space<vmem>>, vector<12x256xf32>,
    %c0_157 = arith.constant 0 : index
    %c16_158 = arith.constant 16 : index
    %154 = vector.load %arg10[%c0_157, %c16_158] : memref<12x290xf32, #tpu.memory_space<vmem>>, vector<12x256xf32>
    %c3_159 = arith.constant 3 : index
    %c0_160 = arith.constant 0 : index
    %155 = vector.load %arg2[%c3_159, %c0_160] : memref<9x256xf32, #tpu.memory_space<vmem>>, vector<1x256xf32>
    %156 = vector.broadcast %155 : vector<1x256xf32> to vector<12x256xf32>
    %157 = arith.mulf %154, %156 : vector<12x256xf32>
    %c36 = arith.constant 36 : index
    %c0_161 = arith.constant 0 : index
    %158 = vector.load %arg11[%c36, %c0_161] : memref<108x256xf32, #tpu.memory_space<vmem>>, vector<12x256xf32>
    tpu.vector_store %arg11[%c36, %c0_161], %157 {strides = array<i32>} : memref<108x256xf32, #tpu.memory_space<vmem>>, vector<12x256xf32>,
    %c0_162 = arith.constant 0 : index
    %c17_163 = arith.constant 17 : index
    %159 = vector.load %arg10[%c0_162, %c17_163] : memref<12x290xf32, #tpu.memory_space<vmem>>, vector<12x256xf32>
    %c4_164 = arith.constant 4 : index
    %c0_165 = arith.constant 0 : index
    %160 = vector.load %arg2[%c4_164, %c0_165] : memref<9x256xf32, #tpu.memory_space<vmem>>, vector<1x256xf32>
    %161 = vector.broadcast %160 : vector<1x256xf32> to vector<12x256xf32>
    %162 = arith.mulf %159, %161 : vector<12x256xf32>
    %c48_166 = arith.constant 48 : index
    %c0_167 = arith.constant 0 : index
    %163 = vector.load %arg11[%c48_166, %c0_167] : memref<108x256xf32, #tpu.memory_space<vmem>>, vector<12x256xf32>
    tpu.vector_store %arg11[%c48_166, %c0_167], %162 {strides = array<i32>} : memref<108x256xf32, #tpu.memory_space<vmem>>, vector<12x256xf32>,
    %c0_168 = arith.constant 0 : index
    %c18_169 = arith.constant 18 : index
    %164 = vector.load %arg10[%c0_168, %c18_169] : memref<12x290xf32, #tpu.memory_space<vmem>>, vector<12x256xf32>
    %c5_170 = arith.constant 5 : index
    %c0_171 = arith.constant 0 : index
    %165 = vector.load %arg2[%c5_170, %c0_171] : memref<9x256xf32, #tpu.memory_space<vmem>>, vector<1x256xf32>
    %166 = vector.broadcast %165 : vector<1x256xf32> to vector<12x256xf32>
    %167 = arith.mulf %164, %166 : vector<12x256xf32>
    %c60 = arith.constant 60 : index
    %c0_172 = arith.constant 0 : index
    %168 = vector.load %arg11[%c60, %c0_172] : memref<108x256xf32, #tpu.memory_space<vmem>>, vector<12x256xf32>
    tpu.vector_store %arg11[%c60, %c0_172], %167 {strides = array<i32>} : memref<108x256xf32, #tpu.memory_space<vmem>>, vector<12x256xf32>,
    %c0_173 = arith.constant 0 : index
    %c32_174 = arith.constant 32 : index
    %169 = vector.load %arg10[%c0_173, %c32_174] : memref<12x290xf32, #tpu.memory_space<vmem>>, vector<12x256xf32>
    %c6_175 = arith.constant 6 : index
    %c0_176 = arith.constant 0 : index
    %170 = vector.load %arg2[%c6_175, %c0_176] : memref<9x256xf32, #tpu.memory_space<vmem>>, vector<1x256xf32>
    %171 = vector.broadcast %170 : vector<1x256xf32> to vector<12x256xf32>
    %172 = arith.mulf %169, %171 : vector<12x256xf32>
    %c72 = arith.constant 72 : index
    %c0_177 = arith.constant 0 : index
    %173 = vector.load %arg11[%c72, %c0_177] : memref<108x256xf32, #tpu.memory_space<vmem>>, vector<12x256xf32>
    tpu.vector_store %arg11[%c72, %c0_177], %172 {strides = array<i32>} : memref<108x256xf32, #tpu.memory_space<vmem>>, vector<12x256xf32>,
    %c0_178 = arith.constant 0 : index
    %c33_179 = arith.constant 33 : index
    %174 = vector.load %arg10[%c0_178, %c33_179] : memref<12x290xf32, #tpu.memory_space<vmem>>, vector<12x256xf32>
    %c7_180 = arith.constant 7 : index
    %c0_181 = arith.constant 0 : index
    %175 = vector.load %arg2[%c7_180, %c0_181] : memref<9x256xf32, #tpu.memory_space<vmem>>, vector<1x256xf32>
    %176 = vector.broadcast %175 : vector<1x256xf32> to vector<12x256xf32>
    %177 = arith.mulf %174, %176 : vector<12x256xf32>
    %c84 = arith.constant 84 : index
    %c0_182 = arith.constant 0 : index
    %178 = vector.load %arg11[%c84, %c0_182] : memref<108x256xf32, #tpu.memory_space<vmem>>, vector<12x256xf32>
    tpu.vector_store %arg11[%c84, %c0_182], %177 {strides = array<i32>} : memref<108x256xf32, #tpu.memory_space<vmem>>, vector<12x256xf32>,
    %c0_183 = arith.constant 0 : index
    %c34_184 = arith.constant 34 : index
    %179 = vector.load %arg10[%c0_183, %c34_184] : memref<12x290xf32, #tpu.memory_space<vmem>>, vector<12x256xf32>
    %c8_185 = arith.constant 8 : index
    %c0_186 = arith.constant 0 : index
    %180 = vector.load %arg2[%c8_185, %c0_186] : memref<9x256xf32, #tpu.memory_space<vmem>>, vector<1x256xf32>
    %181 = vector.broadcast %180 : vector<1x256xf32> to vector<12x256xf32>
    %182 = arith.mulf %179, %181 : vector<12x256xf32>
    %c96 = arith.constant 96 : index
    %c0_187 = arith.constant 0 : index
    %183 = vector.load %arg11[%c96, %c0_187] : memref<108x256xf32, #tpu.memory_space<vmem>>, vector<12x256xf32>
    tpu.vector_store %arg11[%c96, %c0_187], %182 {strides = array<i32>} : memref<108x256xf32, #tpu.memory_space<vmem>>, vector<12x256xf32>,
    %c0_188 = arith.constant 0 : index
    %c0_189 = arith.constant 0 : index
    %184 = vector.load %arg7[%c0_188, %c0_189] : memref<4x108xf32, #tpu.memory_space<vmem>>, vector<4x108xf32>
    %c0_190 = arith.constant 0 : index
    %c0_191 = arith.constant 0 : index
    %185 = vector.load %arg11[%c0_190, %c0_191] : memref<108x256xf32, #tpu.memory_space<vmem>>, vector<108x256xf32>
    %cst_192 = arith.constant dense<0.000000e+00> : vector<4x256xf32>
    %186 = tpu.matmul %184, %185, %cst_192 {dimension_numbers = #tpu.dot_dimension_numbers<[1], [0], [0], [1], [0, 0, 1, 1], [], []>} : vector<4x108xf32>, vector<108x256xf32>, vector<4x256xf32> -> vector<4x256xf32>
    %c12_193 = arith.constant 12 : index
    %c0_194 = arith.constant 0 : index
    %187 = vector.load %arg9[%c12_193, %c0_194] : memref<16x256xf32, #tpu.memory_space<vmem>>, vector<4x256xf32>
    tpu.vector_store %arg9[%c12_193, %c0_194], %186 {strides = array<i32>} : memref<16x256xf32, #tpu.memory_space<vmem>>, vector<4x256xf32>,
    %c0_195 = arith.constant 0 : index
    %c8_196 = arith.constant 8 : index
    %c0_197 = arith.constant 0 : index
    %188 = vector.load %arg8[%c0_195, %c8_196, %c0_197] : memref<1x12x256xf32, #tpu.memory_space<vmem>>, vector<1x4x256xf32>
    %189 = vector.shape_cast %188 : vector<1x4x256xf32> to vector<4x256xf32>
    %190 = vector.shape_cast %186 : vector<4x256xf32> to vector<1x4x256xf32>
    tpu.vector_store %arg8[%c0_195, %c8_196, %c0_197], %190 {strides = array<i32>} : memref<1x12x256xf32, #tpu.memory_space<vmem>>, vector<1x4x256xf32>,
    return
  }
  func.func @transform_0(%arg0: i32) -> (i32, i32, i32) {
    %c0_i32 = arith.constant 0 : i32
    %c0_i32_0 = arith.constant 0 : i32
    %c0_i32_1 = arith.constant 0 : i32
    return %arg0, %c0_i32, %c0_i32_0 : i32, i32, i32
  }
  func.func @transform_1(%arg0: i32) -> (i32, i32) {
    %c0_i32 = arith.constant 0 : i32
    %c0_i32_0 = arith.constant 0 : i32
    %c0_i32_1 = arith.constant 0 : i32
    return %c0_i32, %c0_i32_0 : i32, i32
  }
  func.func @transform_2(%arg0: i32) -> (i32, i32) {
    %c0_i32 = arith.constant 0 : i32
    %c0_i32_0 = arith.constant 0 : i32
    %c0_i32_1 = arith.constant 0 : i32
    return %c0_i32, %c0_i32_0 : i32, i32
  }
  func.func @transform_3(%arg0: i32) -> (i32, i32) {
    %c0_i32 = arith.constant 0 : i32
    %c0_i32_0 = arith.constant 0 : i32
    %c0_i32_1 = arith.constant 0 : i32
    return %c0_i32, %c0_i32_0 : i32, i32
  }
  func.func @transform_4(%arg0: i32) -> (i32, i32) {
    %c0_i32 = arith.constant 0 : i32
    %c0_i32_0 = arith.constant 0 : i32
    %c0_i32_1 = arith.constant 0 : i32
    return %c0_i32, %c0_i32_0 : i32, i32
  }
  func.func @transform_5(%arg0: i32) -> (i32, i32) {
    %c0_i32 = arith.constant 0 : i32
    %c0_i32_0 = arith.constant 0 : i32
    %c0_i32_1 = arith.constant 0 : i32
    return %c0_i32, %c0_i32_0 : i32, i32
  }
  func.func @transform_6(%arg0: i32) -> (i32, i32) {
    %c0_i32 = arith.constant 0 : i32
    %c0_i32_0 = arith.constant 0 : i32
    %c0_i32_1 = arith.constant 0 : i32
    return %c0_i32, %c0_i32_0 : i32, i32
  }
  func.func @transform_7(%arg0: i32) -> (i32, i32, i32) {
    %c0_i32 = arith.constant 0 : i32
    %c0_i32_0 = arith.constant 0 : i32
    %c0_i32_1 = arith.constant 0 : i32
    return %arg0, %c0_i32, %c0_i32_0 : i32, i32, i32
  }
}

</mosaic_0001>

<llo_original>
// kernel: tpu_custom_call.1
$region0: #{tpu_custom_call.1}
  #allocation0 [shape = 'u32[]', space=smem, size = 0x4, offset = 0x4, fixed_abs, tag = 'smem constant byte address 0x4 - core index']
  #allocation1 [shape = 'u32[144,128]{1,0:T(1,128)}', space=vmem, size = 0x12000, scoped, tag = 'internal scratch']
  #allocation2 [shape = 'f32[16,256]{1,0:T(8,128)}', space=vmem, size = 0x4000, scoped, tag = 'scratch operand']
  #allocation3 [shape = 'f32[12,290]{1,0:T(8,128)}', space=vmem, size = 0x6000, scoped, tag = 'scratch operand']
  #allocation4 [shape = 'f32[108,256]{1,0:T(8,128)}', space=vmem, size = 0x1c000, scoped, tag = 'scratch operand']
  %s0 = inlined_call_operand.hbm [shape: f32[2,4,256], index: 0, kind: input, shape index: {}]
  %s1 = inlined_call_operand.vmem [shape: f32[9,256], index: 1, kind: input, shape index: {}]
  %s2 = inlined_call_operand.vmem [shape: f32[12,3], index: 2, kind: input, shape index: {}]
  %s3 = inlined_call_operand.vmem [shape: f32[12,3], index: 3, kind: input, shape index: {}]
  %s4 = inlined_call_operand.vmem [shape: f32[4,36], index: 4, kind: input, shape index: {}]
  %s5 = inlined_call_operand.vmem [shape: f32[4,72], index: 5, kind: input, shape index: {}]
  %s6 = inlined_call_operand.vmem [shape: f32[4,108], index: 6, kind: input, shape index: {}]
  %s7 = inlined_call_operand.vmem [shape: f32[2,12,256], index: 7, kind: output, shape index: {}]
  %s8 = sld [smem:[#allocation0]]
  $region65: #{tpu_custom_call.1} parent=0
    _
  %s10 = ssub.s32 1, %s8
  %s11 = scalar_select 0, %s10, %s8
  $region1: #{tpu_custom_call.1} parent=0
    #allocation5 [shape = 'u8[8192]{0}', space=vmem, size = 0x2000, scoped, tag = 'input window, operand 0']
    #allocation6 [shape = 's32[2]{0}', space=sflag, size = 0x8, scoped, tag = 'scoped memory for tpu_custom_call.1']
    %12 = vsyncpa [#allocation6], 0
    %s13 = scalar_lea.sflag [#allocation6], 1
    %14 = vsyncpa %s13, 0
    loop: start=0, step=1, limit=4
    $region2: #{tpu_custom_call.1} parent=1 // loop_pre_header
      _
    $region3: #{tpu_custom_call.1} parent=1 // loop_header
      %s16 = sphi 0, %s20
      %p17 = scmp.ge.s32.totalorder %s16, 4
      %s26 = sphi 0, %s28
      %s29 = sphi 0, %s26
      %s30 = sphi 0, %s29
      %s46 = sphi 0, %s30
      %s50 = sphi 0, %s50
      %s52 = sphi 0, %s50
      %s53 = sphi 0, %s52
      %s67 = sphi 0, %s53
      %s71 = sphi 0, %s71
      %s73 = sphi 0, %s71
      %s74 = sphi 0, %s73
      %s88 = sphi 0, %s74
      %s92 = sphi 0, %s92
      %s94 = sphi 0, %s92
      %s95 = sphi 0, %s94
      %s109 = sphi 0, %s95
      %s113 = sphi 0, %s113
      %s115 = sphi 0, %s113
      %s116 = sphi 0, %s115
      %s130 = sphi 0, %s116
      %s134 = sphi 0, %s134
      %s136 = sphi 0, %s134
      %s137 = sphi 0, %s136
      %s151 = sphi 0, %s137
      %s155 = sphi 0, %s155
      %s157 = sphi 0, %s155
      %s158 = sphi 0, %s157
      %s172 = sphi 0, %s158
      %s178 = sphi 0, %s180
      %s181 = sphi 0, %s178
      %s182 = sphi 0, %s181
      %s198 = sphi 0, %s182
    $region4: #{tpu_custom_call.1} parent=1 // loop_header_branch
      %19 = sbr.rel (%p17) target = $region8
    $region5: #{tpu_custom_call.1} parent=1 // loop_body
      %s21 = ssub.s32 %s16, 1
      %s22 = ssub.s32 %s16, 2
      %s23 = sadd.s32 %s16, 1
      %s24 = ssub.s32 %s16, %s23
      %p25 = scmp.eq.s32.totalorder %s24, 0
      %s27 = sadd.s32 %s26, 1
      %s28 = scalar_select %p25, %s26, %s27
      %p31 = pneg %p25
      %p32 = scmp.eq.s32.totalorder %s16, 1
      %p33 = por %p31, %p32
      %p34 = scmp.ne.s32.totalorder %s26, %s29
      %p35 = scmp.eq.s32.totalorder %s16, 0
      %p36 = por %p34, %p35
      %p37 = scmp.ne.s32.totalorder %s26, %s29
      %p38 = scmp.eq.s32.totalorder %s21, 1
      %p39 = por %p37, %p38
      %p40 = scmp.ne.s32.totalorder %s29, %s30
      %p41 = scmp.eq.s32.totalorder %s21, 0
      %p42 = por %p40, %p41
      %p43 = scmp.ne.s32.totalorder %s29, %s30
      %p44 = scmp.eq.s32.totalorder %s22, 1
      %p45 = por %p43, %p44
      %p47 = scmp.ne.s32.totalorder %s30, %s46
      %p48 = scmp.eq.s32.totalorder %s22, 0
      %p49 = por %p47, %p48
      %s51 = sadd.s32 %s50, 1
      %p54 = scmp.eq.s32.totalorder %s16, 1
      %p55 = scmp.ne.s32.totalorder %s50, %s52
      %p56 = scmp.eq.s32.totalorder %s16, 0
      %p57 = por %p55, %p56
      %p58 = scmp.ne.s32.totalorder %s50, %s52
      %p59 = scmp.eq.s32.totalorder %s21, 1
      %p60 = por %p58, %p59
      %p61 = scmp.ne.s32.totalorder %s52, %s53
      %p62 = scmp.eq.s32.totalorder %s21, 0
      %p63 = por %p61, %p62
      %p64 = scmp.ne.s32.totalorder %s52, %s53
      %p65 = scmp.eq.s32.totalorder %s22, 1
      %p66 = por %p64, %p65
      %p68 = scmp.ne.s32.totalorder %s53, %s67
      %p69 = scmp.eq.s32.totalorder %s22, 0
      %p70 = por %p68, %p69
      %s72 = sadd.s32 %s71, 1
      %p75 = scmp.eq.s32.totalorder %s16, 1
      %p76 = scmp.ne.s32.totalorder %s71, %s73
      %p77 = scmp.eq.s32.totalorder %s16, 0
      %p78 = por %p76, %p77
      %p79 = scmp.ne.s32.totalorder %s71, %s73
      %p80 = scmp.eq.s32.totalorder %s21, 1
      %p81 = por %p79, %p80
      %p82 = scmp.ne.s32.totalorder %s73, %s74
      %p83 = scmp.eq.s32.totalorder %s21, 0
      %p84 = por %p82, %p83
      %p85 = scmp.ne.s32.totalorder %s73, %s74
      %p86 = scmp.eq.s32.totalorder %s22, 1
      %p87 = por %p85, %p86
      %p89 = scmp.ne.s32.totalorder %s74, %s88
      %p90 = scmp.eq.s32.totalorder %s22, 0
      %p91 = por %p89, %p90
      %s93 = sadd.s32 %s92, 1
      %p96 = scmp.eq.s32.totalorder %s16, 1
      %p97 = scmp.ne.s32.totalorder %s92, %s94
      %p98 = scmp.eq.s32.totalorder %s16, 0
      %p99 = por %p97, %p98
      %p100 = scmp.ne.s32.totalorder %s92, %s94
      %p101 = scmp.eq.s32.totalorder %s21, 1
      %p102 = por %p100, %p101
      %p103 = scmp.ne.s32.totalorder %s94, %s95
      %p104 = scmp.eq.s32.totalorder %s21, 0
      %p105 = por %p103, %p104
      %p106 = scmp.ne.s32.totalorder %s94, %s95
      %p107 = scmp.eq.s32.totalorder %s22, 1
      %p108 = por %p106, %p107
      %p110 = scmp.ne.s32.totalorder %s95, %s109
      %p111 = scmp.eq.s32.totalorder %s22, 0
      %p112 = por %p110, %p111
      %s114 = sadd.s32 %s113, 1
      %p117 = scmp.eq.s32.totalorder %s16, 1
      %p118 = scmp.ne.s32.totalorder %s113, %s115
      %p119 = scmp.eq.s32.totalorder %s16, 0
      %p120 = por %p118, %p119
      %p121 = scmp.ne.s32.totalorder %s113, %s115
      %p122 = scmp.eq.s32.totalorder %s21, 1
      %p123 = por %p121, %p122
      %p124 = scmp.ne.s32.totalorder %s115, %s116
      %p125 = scmp.eq.s32.totalorder %s21, 0
      %p126 = por %p124, %p125
      %p127 = scmp.ne.s32.totalorder %s115, %s116
      %p128 = scmp.eq.s32.totalorder %s22, 1
      %p129 = por %p127, %p128
      %p131 = scmp.ne.s32.totalorder %s116, %s130
      %p132 = scmp.eq.s32.totalorder %s22, 0
      %p133 = por %p131, %p132
      %s135 = sadd.s32 %s134, 1
      %p138 = scmp.eq.s32.totalorder %s16, 1
      %p139 = scmp.ne.s32.totalorder %s134, %s136
      %p140 = scmp.eq.s32.totalorder %s16, 0
      %p141 = por %p139, %p140
      %p142 = scmp.ne.s32.totalorder %s134, %s136
      %p143 = scmp.eq.s32.totalorder %s21, 1
      %p144 = por %p142, %p143
      %p145 = scmp.ne.s32.totalorder %s136, %s137
      %p146 = scmp.eq.s32.totalorder %s21, 0
      %p147 = por %p145, %p146
      %p148 = scmp.ne.s32.totalorder %s136, %s137
      %p149 = scmp.eq.s32.totalorder %s22, 1
      %p150 = por %p148, %p149
      %p152 = scmp.ne.s32.totalorder %s137, %s151
      %p153 = scmp.eq.s32.totalorder %s22, 0
      %p154 = por %p152, %p153
      %s156 = sadd.s32 %s155, 1
      %p159 = scmp.eq.s32.totalorder %s16, 1
      %p160 = scmp.ne.s32.totalorder %s155, %s157
      %p161 = scmp.eq.s32.totalorder %s16, 0
      %p162 = por %p160, %p161
      %p163 = scmp.ne.s32.totalorder %s155, %s157
      %p164 = scmp.eq.s32.totalorder %s21, 1
      %p165 = por %p163, %p164
      %p166 = scmp.ne.s32.totalorder %s157, %s158
      %p167 = scmp.eq.s32.totalorder %s21, 0
      %p168 = por %p166, %p167
      %p169 = scmp.ne.s32.totalorder %s157, %s158
      %p170 = scmp.eq.s32.totalorder %s22, 1
      %p171 = por %p169, %p170
      %p173 = scmp.ne.s32.totalorder %s158, %s172
      %p174 = scmp.eq.s32.totalorder %s22, 0
      %p175 = por %p173, %p174
      %s176 = ssub.s32 %s16, %s23
      %p177 = scmp.eq.s32.totalorder %s176, 0
      %s179 = sadd.s32 %s178, 1
      %s180 = scalar_select %p177, %s178, %s179
      %p183 = pneg %p177
      %p184 = scmp.eq.s32.totalorder %s16, 1
      %p185 = por %p183, %p184
      %p186 = scmp.ne.s32.totalorder %s178, %s181
      %p187 = scmp.eq.s32.totalorder %s16, 0
      %p188 = por %p186, %p187
      %p189 = scmp.ne.s32.totalorder %s178, %s181
      %p190 = scmp.eq.s32.totalorder %s21, 1
      %p191 = por %p189, %p190
      %p192 = scmp.ne.s32.totalorder %s181, %s182
      %p193 = scmp.eq.s32.totalorder %s21, 0
      %p194 = por %p192, %p193
      %p195 = scmp.ne.s32.totalorder %s181, %s182
      %p196 = scmp.eq.s32.totalorder %s22, 1
      %p197 = por %p195, %p196
      %p199 = scmp.ne.s32.totalorder %s182, %s198
      %p200 = scmp.eq.s32.totalorder %s22, 0
      %p201 = por %p199, %p200
      %p202 = scmp.le.s32.totalorder 1, %s16
      %p203 = scmp.lt.s32.totalorder %s16, 3
      %p204 = pnand %p202, %p203
      %p205 = pneg %p204
      // Predicated region
      $region9: #{tpu_custom_call.1} parent=5 // pred_check
        _
      $region10: #{tpu_custom_call.1} parent=5 // pred_check_branch
        %207 = sbr.rel (%p204) target = $region12
      $region11: #{tpu_custom_call.1} parent=5 // pred_region
        %s208 = ssub.s32 %s16, 1
        // Predicated region
        $region13: #{tpu_custom_call.1} parent=11 // pred_check
          %p209 = pneg %p63
        $region14: #{tpu_custom_call.1} parent=11 // pred_check_branch
          %211 = sbr.rel (%p209) target = $region16
        $region15: #{tpu_custom_call.1} parent=11 // pred_region
          _
        $region16: #{tpu_custom_call.1} parent=11 // pred_fallthru
          _
        // Predicated region
        $region17: #{tpu_custom_call.1} parent=11 // pred_check
          %p212 = pneg %p84
        $region18: #{tpu_custom_call.1} parent=11 // pred_check_branch
          %214 = sbr.rel (%p212) target = $region20
        $region19: #{tpu_custom_call.1} parent=11 // pred_region
          _
        $region20: #{tpu_custom_call.1} parent=11 // pred_fallthru
          _
        // Predicated region
        $region21: #{tpu_custom_call.1} parent=11 // pred_check
          %p215 = pneg %p105
        $region22: #{tpu_custom_call.1} parent=11 // pred_check_branch
          %217 = sbr.rel (%p215) target = $region24
        $region23: #{tpu_custom_call.1} parent=11 // pred_region
          _
        $region24: #{tpu_custom_call.1} parent=11 // pred_fallthru
          _
        // Predicated region
        $region25: #{tpu_custom_call.1} parent=11 // pred_check
          %p218 = pneg %p126
        $region26: #{tpu_custom_call.1} parent=11 // pred_check_branch
          %220 = sbr.rel (%p218) target = $region28
        $region27: #{tpu_custom_call.1} parent=11 // pred_region
          _
        $region28: #{tpu_custom_call.1} parent=11 // pred_fallthru
          _
        // Predicated region
        $region29: #{tpu_custom_call.1} parent=11 // pred_check
          %p221 = pneg %p147
        $region30: #{tpu_custom_call.1} parent=11 // pred_check_branch
          %223 = sbr.rel (%p221) target = $region32
        $region31: #{tpu_custom_call.1} parent=11 // pred_region
          _
        $region32: #{tpu_custom_call.1} parent=11 // pred_fallthru
          _
        // Predicated region
        $region33: #{tpu_custom_call.1} parent=11 // pred_check
          %p224 = pneg %p168
        $region34: #{tpu_custom_call.1} parent=11 // pred_check_branch
          %226 = sbr.rel (%p224) target = $region36
        $region35: #{tpu_custom_call.1} parent=11 // pred_region
          _
        $region36: #{tpu_custom_call.1} parent=11 // pred_fallthru
          _
      $region12: #{tpu_custom_call.1} parent=5 // pred_fallthru
        _
      %p227 = scmp.lt.s32.totalorder %s16, 2
      // Predicated region
      $region37: #{tpu_custom_call.1} parent=5 // pred_check
        %p228 = pneg %p227
      $region38: #{tpu_custom_call.1} parent=5 // pred_check_branch
        %230 = sbr.rel (%p228) target = $region40
      $region39: #{tpu_custom_call.1} parent=5 // pred_region
        // Predicated region
        $region41: #{tpu_custom_call.1} parent=39 // pred_check
          %p231 = pneg %p36
        $region42: #{tpu_custom_call.1} parent=39 // pred_check_branch
          %233 = sbr.rel (%p231) target = $region44
        $region43: #{tpu_custom_call.1} parent=39 // pred_region
          %s234 = sand.u32 %s26, 1
          %s235 = scalar_lea.sflag [#allocation6], %s234
          %s236 = sand.u32 %s26, 1
          %s237 = smul.addr %s236, 8
          %s238 = scalar_lea.vmem [#allocation5], %s237
          %s240 = ssub.s32 128, 128
          %241 = vsyncadd %s235, %s240
          %s242 = smul.addr %s16, 2
          %s243 = smul.addr %s242, 64
          %s244 = scalar_lea.hbm %s0, %s243
          %s246 = sshll.u32 %s238, 4
          %s247 = int_to_ptr.vmem [resolvable:$true] %s246
          %249 = dma.hbm_to_vmem [thread:$0]  %s244, 128, %s247, %s235
        $region44: #{tpu_custom_call.1} parent=39 // pred_fallthru
          _
      $region40: #{tpu_custom_call.1} parent=5 // pred_fallthru
        _
      %p250 = scmp.le.s32.totalorder 1, %s16
      %p251 = scmp.lt.s32.totalorder %s16, 3
      %p252 = pnand %p250, %p251
      %p253 = pneg %p252
      // Predicated region
      $region45: #{tpu_custom_call.1} parent=5 // pred_check
        _
      $region46: #{tpu_custom_call.1} parent=5 // pred_check_branch
        %255 = sbr.rel (%p252) target = $region48
      $region47: #{tpu_custom_call.1} parent=5 // pred_region
        %s256 = ssub.s32 %s16, 1
        %s257 = sand.u32 %s29, 1
        %s258 = scalar_lea.sflag [#allocation6], %s257
        %s259 = sand.u32 %s29, 1
        %s260 = smul.addr %s259, 8
        %s261 = scalar_lea.vmem [#allocation5], %s260
        // Predicated region
        $region49: #{tpu_custom_call.1} parent=47 // pred_check
          %p262 = pneg %p42
        $region50: #{tpu_custom_call.1} parent=47 // pred_check_branch
          %264 = sbr.rel (%p262) target = $region52
        $region51: #{tpu_custom_call.1} parent=47 // pred_region
          %265 = dma.done %s258, 128
        $region52: #{tpu_custom_call.1} parent=47 // pred_fallthru
          _
        %s266 = sand.u32 %s29, 1
        %s267 = scalar_lea.sflag [#allocation6], %s266
        %s268 = sand.u32 %s29, 1
        %s269 = smul.addr %s268, 8
        %s270 = scalar_lea.vmem [#allocation5], %s269
        %p271 = pneg %p42
        %p272 = pneg %p39
        %p273 = pneg %p63
        %p274 = pneg %p60
        %p275 = pneg %p84
        %p276 = pneg %p81
        %p277 = pneg %p105
        %p278 = pneg %p102
        %p279 = pneg %p126
        %p280 = pneg %p123
        %p281 = pneg %p147
        %p282 = pneg %p144
        %p283 = pneg %p168
        %p284 = pneg %p165
        %p285 = pneg %p194
        %p286 = pneg %p191
        %p287 = scmp.lt.s32.totalorder %s21, 1
        %s288 = scalar_select %p287, %s21, 1
        %s289 = smul.addr %s288, 4
        %s290 = smul.addr %s289, 8
        %s291 = scalar_lea.vmem %s7, %s290
        %p292 = scmp.lt.s32.totalorder %s21, 1
        %s293 = scalar_select %p292, %s21, 1
        %s294 = smul.addr %s293, 4
        %s295 = smul.addr %s294, 8
        %s296 = scalar_lea.vmem %s7, %s295
        %297 = vst [vmem:[#allocation3] sm:$0xff] 0.0
        %298 = vst [vmem:[#allocation3 + $0x8] sm:$0xff] 0.0
        %vm299 = vcmask 277504
        %300 = vst.msk [vmem:[#allocation3 + $0x10] sm:$0xff] %vm299, 0.0
        %301 = vst [vmem:[#allocation3 + $0x18] sm:$0xf] 0.0
        %302 = vst [vmem:[#allocation3 + $0x20] sm:$0xf] 0.0
        %vm303 = vcmask 273408
        %304 = vst.msk [vmem:[#allocation3 + $0x28] sm:$0xf] %vm303, 0.0
        %v305 = vld [vmem:[%s261] sm:$0xff]
        %v307 = vcombine.high %v305, %v305
        %309 = vst [vmem:[#allocation2] sm:$0xf] %v305
        %310 = vst [vmem:[#allocation2 + $0x8] sm:$0xf] %v307
        %v311 = vld [vmem:[#allocation2] sm:$0xf]
        %v312 = vld [vmem:[#allocation2 + $0x8] sm:$0xf]
        %v313 = vld [vmem:[%s2] sm:$0xf]
        %v314 = vld [vmem:[%s3] sm:$0xf]
        %316 = vset.pattern.permute.xlu0 0
        %317 = vperm.xlu0 %316, %v313
        %v318 = vpop.permute.xlu0 %317
        %v320 = vmul.f32 %v311, %v318
        %v321 = vmul.f32 %v312, %v318
        %323 = vset.pattern.permute.xlu0 0
        %324 = vperm.xlu0 %323, %v314
        %v325 = vpop.permute.xlu0 %324
        %v327 = vadd.f32 %v320, %v325
        %v328 = vadd.f32 %v321, %v325
        %v329 = vmax.f32 %v327, 0.0
        %v330 = vmax.f32 %v328, 0.0
        %333 = vrot.lane.b32.xlu0 %v329, 17
        %v334 = vpop.permute.xlu0 %333
        %335 = vrot.lane.b32.xlu0 %v330, 17
        %v336 = vpop.permute.xlu0 %335
        %vm337 = vcmask 138240
        %v338 = vsel %vm337, %v334, %v336
        %vm342 = vcmask 1043592
        %343 = vst.msk [vmem:[#allocation3] sm:$0xf] %vm342, %v334
        %344 = vst [vmem:[#allocation3 + $0x8] sm:$0xf] %v338
        %vm345 = vcmask 134144
        %346 = vst.msk [vmem:[#allocation3 + $0x10] sm:$0xf] %vm345, %v336
        %v347 = vld [vmem:[#allocation3] sm:$0xf]
        %v348 = vld [vmem:[#allocation3 + $0x8] sm:$0xf]
        %v349 = vld [vmem:[%s1] ss:$8 sm:$0x3]
        %v351 = vlaneseq
        %v352 = vshrl.u32 %v351, 7
        %v353 = vsub.s32 0, %v352
        %v354 = vrot.slane %v349, %v353
        %v355 = vlaneseq
        %v356 = vshrl.u32 %v355, 7
        %v357 = vsub.s32 1, %v356
        %v358 = vrot.slane %v349, %v357
        %v361 = vmul.f32 %v347, %v354
        %v362 = vmul.f32 %v348, %v358
        %363 = vst [vmem:[#allocation4] sm:$0xf] %v361
        %364 = vst [vmem:[#allocation4 + $0x8] sm:$0xf] %v362
        %v365 = vld [vmem:[#allocation3] sm:$0xf]
        %v366 = vld [vmem:[#allocation3 + $0x8] sm:$0xf]
        %v367 = vld [vmem:[#allocation3 + $0x10] sm:$0xf]
        %s368 = scalar_lea.vmem %s1, 1
        %v369 = vld [vmem:[%s368] ss:$8 sm:$0x3]
        %v371 = vlaneseq
        %v372 = vshrl.u32 %v371, 7
        %v373 = vsub.s32 0, %v372
        %v374 = vrot.slane %v369, %v373
        %v375 = vlaneseq
        %v376 = vshrl.u32 %v375, 7
        %v377 = vsub.s32 1, %v376
        %v378 = vrot.slane %v369, %v377
        %379 = vrot.lane.b32.xlu0 %v374, 1
        %v380 = vpop.permute.xlu0 %379
        %381 = vrot.lane.b32.xlu0 %v378, 1
        %v382 = vpop.permute.xlu0 %381
        %vm383 = vcmask 7168
        %v384 = vsel %vm383, %v380, %v382
        %v388 = vmul.f32 %v365, %v380
        %v389 = vmul.f32 %v366, %v384
        %v390 = vmul.f32 %v367, %v382
        %v394 = vrot.slane %v388, 4
        %v395 = vrot.slane %v389, 4
        %v396 = vrot.slane %v390, 4
        %397 = vrot.lane.b32.xlu0 %v394, 127
        %v398 = vpop.permute.xlu0 %397
        %399 = vrot.lane.b32.xlu0 %v395, 127
        %v400 = vpop.permute.xlu0 %399
        %401 = vrot.lane.b32.xlu0 %v396, 127
        %v402 = vpop.permute.xlu0 %401
        %vm403 = vcmask 1039360
        %v404 = vsel %vm403, %v398, %v400
        %v405 = vsel %vm403, %v400, %v402
        %408 = vst [vmem:[#allocation4] sm:$0xf0] %v404
        %409 = vst [vmem:[#allocation4 + $0x8] sm:$0xf0] %v405
        %v410 = vld [vmem:[#allocation3] sm:$0xf]
        %v411 = vld [vmem:[#allocation3 + $0x8] sm:$0xf]
        %v412 = vld [vmem:[#allocation3 + $0x10] sm:$0xf]
        %s413 = scalar_lea.vmem %s1, 2
        %v414 = vld [vmem:[%s413] ss:$8 sm:$0x3]
        %v416 = vlaneseq
        %v417 = vshrl.u32 %v416, 7
        %v418 = vsub.s32 0, %v417
        %v419 = vrot.slane %v414, %v418
        %v420 = vlaneseq
        %v421 = vshrl.u32 %v420, 7
        %v422 = vsub.s32 1, %v421
        %v423 = vrot.slane %v414, %v422
        %424 = vrot.lane.b32.xlu0 %v419, 2
        %v425 = vpop.permute.xlu0 %424
        %426 = vrot.lane.b32.xlu0 %v423, 2
        %v427 = vpop.permute.xlu0 %426
        %vm428 = vcmask 15360
        %v429 = vsel %vm428, %v425, %v427
        %v433 = vmul.f32 %v410, %v425
        %v434 = vmul.f32 %v411, %v429
        %v435 = vmul.f32 %v412, %v427
        %439 = vrot.lane.b32.xlu0 %v433, 126
        %v440 = vpop.permute.xlu0 %439
        %441 = vrot.lane.b32.xlu0 %v434, 126
        %v442 = vpop.permute.xlu0 %441
        %443 = vrot.lane.b32.xlu0 %v435, 126
        %v444 = vpop.permute.xlu0 %443
        %vm445 = vcmask 1031168
        %v446 = vsel %vm445, %v440, %v442
        %v447 = vsel %vm445, %v442, %v444
        %450 = vst [vmem:[#allocation4 + $0x10] sm:$0xf] %v446
        %451 = vst [vmem:[#allocation4 + $0x18] sm:$0xf] %v447
        %v452 = vld [vmem:[#allocation3] sm:$0xf]
        %v453 = vld [vmem:[#allocation3 + $0x8] sm:$0xf]
        %v454 = vld [vmem:[#allocation3 + $0x10] sm:$0xf]
        %s455 = scalar_lea.vmem %s1, 3
        %v456 = vld [vmem:[%s455] ss:$8 sm:$0x3]
        %v458 = vlaneseq
        %v459 = vshrl.u32 %v458, 7
        %v460 = vsub.s32 0, %v459
        %v461 = vrot.slane %v456, %v460
        %v462 = vlaneseq
        %v463 = vshrl.u32 %v462, 7
        %v464 = vsub.s32 1, %v463
        %v465 = vrot.slane %v456, %v464
        %466 = vrot.lane.b32.xlu0 %v461, 16
        %v467 = vpop.permute.xlu0 %466
        %468 = vrot.lane.b32.xlu0 %v465, 16
        %v469 = vpop.permute.xlu0 %468
        %vm470 = vcmask 130048
        %v471 = vsel %vm470, %v467, %v469
        %v475 = vmul.f32 %v452, %v467
        %v476 = vmul.f32 %v453, %v471
        %v477 = vmul.f32 %v454, %v469
        %v481 = vrot.slane %v475, 4
        %v482 = vrot.slane %v476, 4
        %v483 = vrot.slane %v477, 4
        %484 = vrot.lane.b32.xlu0 %v481, 112
        %v485 = vpop.permute.xlu0 %484
        %486 = vrot.lane.b32.xlu0 %v482, 112
        %v487 = vpop.permute.xlu0 %486
        %488 = vrot.lane.b32.xlu0 %v483, 112
        %v489 = vpop.permute.xlu0 %488
        %vm490 = vcmask 916480
        %v491 = vsel %vm490, %v485, %v487
        %v492 = vsel %vm490, %v487, %v489
        %495 = vst [vmem:[#allocation4 + $0x10] sm:$0xf0] %v491
        %496 = vst [vmem:[#allocation4 + $0x18] sm:$0xf0] %v492
        %v497 = vld [vmem:[#allocation3] sm:$0xf]
        %v498 = vld [vmem:[#allocation3 + $0x8] sm:$0xf]
        %v499 = vld [vmem:[#allocation3 + $0x10] sm:$0xf]
        %s500 = scalar_lea.vmem %s1, 4
        %v501 = vld [vmem:[%s500] ss:$8 sm:$0x3]
        %v503 = vlaneseq
        %v504 = vshrl.u32 %v503, 7
        %v505 = vsub.s32 0, %v504
        %v506 = vrot.slane %v501, %v505
        %v507 = vlaneseq
        %v508 = vshrl.u32 %v507, 7
        %v509 = vsub.s32 1, %v508
        %v510 = vrot.slane %v501, %v509
        %511 = vrot.lane.b32.xlu0 %v506, 17
        %v512 = vpop.permute.xlu0 %511
        %513 = vrot.lane.b32.xlu0 %v510, 17
        %v514 = vpop.permute.xlu0 %513
        %v515 = vsel %vm337, %v512, %v514
        %v519 = vmul.f32 %v497, %v512
        %v520 = vmul.f32 %v498, %v515
        %v521 = vmul.f32 %v499, %v514
        %525 = vrot.lane.b32.xlu0 %v519, 111
        %v526 = vpop.permute.xlu0 %525
        %527 = vrot.lane.b32.xlu0 %v520, 111
        %v528 = vpop.permute.xlu0 %527
        %529 = vrot.lane.b32.xlu0 %v521, 111
        %v530 = vpop.permute.xlu0 %529
        %vm531 = vcmask 908288
        %v532 = vsel %vm531, %v526, %v528
        %v533 = vsel %vm531, %v528, %v530
        %536 = vst [vmem:[#allocation4 + $0x20] sm:$0xf] %v532
        %537 = vst [vmem:[#allocation4 + $0x28] sm:$0xf] %v533
        %v538 = vld [vmem:[#allocation3] sm:$0xf]
        %v539 = vld [vmem:[#allocation3 + $0x8] sm:$0xf]
        %v540 = vld [vmem:[#allocation3 + $0x10] sm:$0xf]
        %s541 = scalar_lea.vmem %s1, 5
        %v542 = vld [vmem:[%s541] ss:$8 sm:$0x3]
        %v544 = vlaneseq
        %v545 = vshrl.u32 %v544, 7
        %v546 = vsub.s32 0, %v545
        %v547 = vrot.slane %v542, %v546
        %v548 = vlaneseq
        %v549 = vshrl.u32 %v548, 7
        %v550 = vsub.s32 1, %v549
        %v551 = vrot.slane %v542, %v550
        %552 = vrot.lane.b32.xlu0 %v547, 18
        %v553 = vpop.permute.xlu0 %552
        %554 = vrot.lane.b32.xlu0 %v551, 18
        %v555 = vpop.permute.xlu0 %554
        %vm556 = vcmask 146432
        %v557 = vsel %vm556, %v553, %v555
        %v561 = vmul.f32 %v538, %v553
        %v562 = vmul.f32 %v539, %v557
        %v563 = vmul.f32 %v540, %v555
        %v567 = vrot.slane %v561, 4
        %v568 = vrot.slane %v562, 4
        %v569 = vrot.slane %v563, 4
        %570 = vrot.lane.b32.xlu0 %v567, 110
        %v571 = vpop.permute.xlu0 %570
        %572 = vrot.lane.b32.xlu0 %v568, 110
        %v573 = vpop.permute.xlu0 %572
        %574 = vrot.lane.b32.xlu0 %v569, 110
        %v575 = vpop.permute.xlu0 %574
        %vm576 = vcmask 900096
        %v577 = vsel %vm576, %v571, %v573
        %v578 = vsel %vm576, %v573, %v575
        %581 = vst [vmem:[#allocation4 + $0x20] sm:$0xf0] %v577
        %582 = vst [vmem:[#allocation4 + $0x28] sm:$0xf0] %v578
        %v583 = vld [vmem:[#allocation3] sm:$0xf]
        %v584 = vld [vmem:[#allocation3 + $0x8] sm:$0xf]
        %v585 = vld [vmem:[#allocation3 + $0x10] sm:$0xf]
        %s586 = scalar_lea.vmem %s1, 6
        %v587 = vld [vmem:[%s586] ss:$8 sm:$0x3]
        %v589 = vlaneseq
        %v590 = vshrl.u32 %v589, 7
        %v591 = vsub.s32 0, %v590
        %v592 = vrot.slane %v587, %v591
        %v593 = vlaneseq
        %v594 = vshrl.u32 %v593, 7
        %v595 = vsub.s32 1, %v594
        %v596 = vrot.slane %v587, %v595
        %597 = vrot.lane.b32.xlu0 %v592, 32
        %v598 = vpop.permute.xlu0 %597
        %599 = vrot.lane.b32.xlu0 %v596, 32
        %v600 = vpop.permute.xlu0 %599
        %vm601 = vcmask 261120
        %v602 = vsel %vm601, %v598, %v600
        %v606 = vmul.f32 %v583, %v598
        %v607 = vmul.f32 %v584, %v602
        %v608 = vmul.f32 %v585, %v600
        %612 = vrot.lane.b32.xlu0 %v606, 96
        %v613 = vpop.permute.xlu0 %612
        %614 = vrot.lane.b32.xlu0 %v607, 96
        %v615 = vpop.permute.xlu0 %614
        %616 = vrot.lane.b32.xlu0 %v608, 96
        %v617 = vpop.permute.xlu0 %616
        %vm618 = vcmask 785408
        %v619 = vsel %vm618, %v613, %v615
        %v620 = vsel %vm618, %v615, %v617
        %623 = vst [vmem:[#allocation4 + $0x30] sm:$0xf] %v619
        %624 = vst [vmem:[#allocation4 + $0x38] sm:$0xf] %v620
        %v625 = vld [vmem:[#allocation3] sm:$0xf]
        %v626 = vld [vmem:[#allocation3 + $0x8] sm:$0xf]
        %v627 = vld [vmem:[#allocation3 + $0x10] sm:$0xf]
        %s628 = scalar_lea.vmem %s1, 7
        %v629 = vld [vmem:[%s628] ss:$8 sm:$0x3]
        %v631 = vlaneseq
        %v632 = vshrl.u32 %v631, 7
        %v633 = vsub.s32 0, %v632
        %v634 = vrot.slane %v629, %v633
        %v635 = vlaneseq
        %v636 = vshrl.u32 %v635, 7
        %v637 = vsub.s32 1, %v636
        %v638 = vrot.slane %v629, %v637
        %639 = vrot.lane.b32.xlu0 %v634, 33
        %v640 = vpop.permute.xlu0 %639
        %641 = vrot.lane.b32.xlu0 %v638, 33
        %v642 = vpop.permute.xlu0 %641
        %vm643 = vcmask 269312
        %v644 = vsel %vm643, %v640, %v642
        %v648 = vmul.f32 %v625, %v640
        %v649 = vmul.f32 %v626, %v644
        %v650 = vmul.f32 %v627, %v642
        %v654 = vrot.slane %v648, 4
        %v655 = vrot.slane %v649, 4
        %v656 = vrot.slane %v650, 4
        %657 = vrot.lane.b32.xlu0 %v654, 95
        %v658 = vpop.permute.xlu0 %657
        %659 = vrot.lane.b32.xlu0 %v655, 95
        %v660 = vpop.permute.xlu0 %659
        %661 = vrot.lane.b32.xlu0 %v656, 95
        %v662 = vpop.permute.xlu0 %661
        %vm663 = vcmask 777216
        %v664 = vsel %vm663, %v658, %v660
        %v665 = vsel %vm663, %v660, %v662
        %668 = vst [vmem:[#allocation4 + $0x30] sm:$0xf0] %v664
        %669 = vst [vmem:[#allocation4 + $0x38] sm:$0xf0] %v665
        %v670 = vld [vmem:[#allocation3] sm:$0xf]
        %v671 = vld [vmem:[#allocation3 + $0x8] sm:$0xf]
        %v672 = vld [vmem:[#allocation3 + $0x10] sm:$0xf]
        %s673 = scalar_lea.vmem %s1, 16
        %v674 = vld [vmem:[%s673] ss:$8 sm:$0x3]
        %v676 = vlaneseq
        %v677 = vshrl.u32 %v676, 7
        %v678 = vsub.s32 0, %v677
        %v679 = vrot.slane %v674, %v678
        %v680 = vlaneseq
        %v681 = vshrl.u32 %v680, 7
        %v682 = vsub.s32 1, %v681
        %v683 = vrot.slane %v674, %v682
        %684 = vrot.lane.b32.xlu0 %v679, 34
        %v685 = vpop.permute.xlu0 %684
        %686 = vrot.lane.b32.xlu0 %v683, 34
        %v687 = vpop.permute.xlu0 %686
        %v688 = vsel %vm299, %v685, %v687
        %v692 = vmul.f32 %v670, %v685
        %v693 = vmul.f32 %v671, %v688
        %v694 = vmul.f32 %v672, %v687
        %698 = vrot.lane.b32.xlu0 %v692, 94
        %v699 = vpop.permute.xlu0 %698
        %700 = vrot.lane.b32.xlu0 %v693, 94
        %v701 = vpop.permute.xlu0 %700
        %702 = vrot.lane.b32.xlu0 %v694, 94
        %v703 = vpop.permute.xlu0 %702
        %vm704 = vcmask 769024
        %v705 = vsel %vm704, %v699, %v701
        %v706 = vsel %vm704, %v701, %v703
        %709 = vst [vmem:[#allocation4 + $0x40] sm:$0xf] %v705
        %710 = vst [vmem:[#allocation4 + $0x48] sm:$0xf] %v706
        %v711 = vld [vmem:[%s4] sm:$0xf]
        %v712 = vld [vmem:[#allocation4] sm:$0xff]
        %v713 = vld [vmem:[#allocation4 + $0x8] sm:$0xff]
        %v714 = vld [vmem:[#allocation4 + $0x10] sm:$0xff]
        %v715 = vld [vmem:[#allocation4 + $0x18] sm:$0xff]
        %v716 = vld [vmem:[#allocation4 + $0x20] sm:$0xff]
        %v717 = vld [vmem:[#allocation4 + $0x28] sm:$0xff]
        %v718 = vld [vmem:[#allocation4 + $0x30] sm:$0xff]
        %v719 = vld [vmem:[#allocation4 + $0x38] sm:$0xff]
        %v720 = vld [vmem:[#allocation4 + $0x40] sm:$0xf]
        %v721 = vld [vmem:[#allocation4 + $0x48] sm:$0xf]
        %vm722 = vcmask 293888
        %v724 = vsel %vm722, %v711, 0
        %vm726 = vcmask 1043456
        %v728 = vsel %vm726, %v720, 0
        %v731 = vsel %vm726, %v721, 0
        %733 = vmatprep.subr.mxu0 %v713
        %734 = vmatpush1.msra.mxu0 %v712
        %735 = vmatprep.subr.mxu0 %v715
        %736 = vmatpush1.msra.mxu0 %v714
        %737 = vmatprep.subr.mxu0 %v717
        %738 = vmatpush1.msra.mxu0 %v716
        %739 = vmatprep.subr.mxu0 %v719
        %740 = vmatpush1.msra.mxu0 %v718
        %741 = vmatprep.subr.mxu0 %v731
        %742 = vmatpush1.msra.mxu0 %v728
        %743 = vmatprep.subr.mxu0 0.0
        %744 = vmatpush1.msra.mxu0 0.0
        %745 = vmatprep.subr.mxu0 0.0
        %746 = vmatpush1.msra.mxu0 0.0
        %747 = vmatprep.subr.mxu0 0.0
        %748 = vmatpush1.msra.mxu0 0.0
        %749 = vmatprep.subr.mxu0 0.0
        %750 = vmatpush1.msra.mxu0 0.0
        %751 = vmatprep.subr.mxu0 0.0
        %752 = vmatpush1.msra.mxu0 0.0
        %753 = vmatprep.subr.mxu0 0.0
        %754 = vmatpush1.msra.mxu0 0.0
        %755 = vmatprep.subr.mxu0 0.0
        %756 = vmatpush1.msra.mxu0 0.0
        %757 = vmatprep.subr.mxu0 0.0
        %758 = vmatpush1.msra.mxu0 0.0
        %759 = vmatprep.subr.mxu0 0.0
        %760 = vmatpush1.msra.mxu0 0.0
        %761 = vmatprep.subr.mxu0 0.0
        %762 = vmatpush1.msra.mxu0 0.0
        %763 = vmatprep.subr.mxu0 0.0
        %764 = vmatpush1.msra.mxu0 0.0
        %765 = vmatprep.subr.mxu0 0.0
        %766 = vmatpush1.msra.mxu0 0.0
        %767 = vmatprep.subr.mxu0 0.0
        %768 = vmatpush1.msra.mxu0 0.0
        %769 = vmatprep.subr.mxu0 0.0
        %770 = vmatpush1.msra.mxu0 0.0
        %771 = vmatprep.subr.mxu0 0.0
        %772 = vmatpush1.msra.mxu0 0.0
        %773 = vmatprep.subr.mxu0 0.0
        %774 = vmatpush1.msra.mxu0 0.0
        %775 = vmatprep.subr.mxu0 0.0
        %776 = vmatpush1.msra.mxu0 0.0
        %777 = vmatprep.subr.mxu0 0.0
        %778 = vmatpush1.msra.mxu0 0.0
        %779 = vmatprep.subr.mxu0 0.0
        %780 = vmatpush1.msra.mxu0 0.0
        %781 = vmatprep.subr.mxu0 0.0
        %782 = vmatpush1.msra.mxu0 0.0
        %783 = vmatprep.subr.mxu0 0.0
        %784 = vmatpush1.msra.mxu0 0.0
        %785 = vmatprep.subr.mxu0 0.0
        %786 = vmatpush1.msra.mxu0 0.0
        %787 = vmatprep.subr.mxu0 0.0
        %788 = vmatpush1.msra.mxu0 0.0
        %789 = vmatprep.subr.mxu0 0.0
        %790 = vmatpush1.msra.mxu0 0.0
        %791 = vmatprep.subr.mxu0 0.0
        %792 = vmatpush1.msra.mxu0 0.0
        %793 = vmatprep.subr.mxu0 0.0
        %794 = vmatpush1.msra.mxu0 0.0
        %795 = vmatprep.subr.mxu0 0.0
        %796 = vmatpush1.msra.mxu0 0.0
        %797 = vmatprep.mubr.f32.mxu0 0.0
        %798 = vmatmul.mubr.f32.gmra.mrb[0].mxu0 %v724
        %v799 = vpop.f32.mrb[0].mxu0
        %v800 = vadd.f32 0.0, %v799
        %v801 = vpop.f32.mrb[0].mxu0
        %v802 = vadd.f32 0.0, %v801
        %803 = vdwg.mxu0
        %v806 = vrot.slane %v800, 4
        %v807 = vrot.slane %v802, 4
        %810 = vst [vmem:[#allocation2] sm:$0xf0] %v806
        %811 = vst [vmem:[#allocation2 + $0x8] sm:$0xf0] %v807
        %812 = vst [vmem:[%s296] sm:$0xf] %v800
        %813 = vst [vmem:[%s296 + $0x8] sm:$0xf] %v802
        %v814 = vld [vmem:[#allocation2] sm:$0xff]
        %v815 = vld [vmem:[#allocation2 + $0x8] sm:$0xff]
        %v816 = vld [vmem:[%s2] sm:$0xff]
        %v817 = vld [vmem:[%s3] sm:$0xff]
        %819 = vset.pattern.permute.xlu0 1
        %820 = vperm.xlu0 %819, %v816
        %v821 = vpop.permute.xlu0 %820
        %v823 = vmul.f32 %v814, %v821
        %v824 = vmul.f32 %v815, %v821
        %826 = vset.pattern.permute.xlu0 1
        %827 = vperm.xlu0 %826, %v817
        %v828 = vpop.permute.xlu0 %827
        %v830 = vadd.f32 %v823, %v828
        %v831 = vadd.f32 %v824, %v828
        %v832 = vmax.f32 %v830, 0.0
        %v833 = vmax.f32 %v831, 0.0
        %836 = vrot.lane.b32.xlu0 %v832, 17
        %v837 = vpop.permute.xlu0 %836
        %838 = vrot.lane.b32.xlu0 %v833, 17
        %v839 = vpop.permute.xlu0 %838
        %v840 = vsel %vm337, %v837, %v839
        %vm844 = vcmask 1047688
        %845 = vst.msk [vmem:[#allocation3] sm:$0xff] %vm844, %v837
        %846 = vst [vmem:[#allocation3 + $0x8] sm:$0xff] %v840
        %847 = vst.msk [vmem:[#allocation3 + $0x10] sm:$0xff] %vm337, %v839
        %v848 = vld [vmem:[#allocation3] sm:$0xff]
        %v849 = vld [vmem:[#allocation3 + $0x8] sm:$0xff]
        %v850 = vld [vmem:[%s1] ss:$8 sm:$0x3]
        %v852 = vlaneseq
        %v853 = vshrl.u32 %v852, 7
        %v854 = vsub.s32 0, %v853
        %v855 = vrot.slane %v850, %v854
        %v856 = vlaneseq
        %v857 = vshrl.u32 %v856, 7
        %v858 = vsub.s32 1, %v857
        %v859 = vrot.slane %v850, %v858
        %v862 = vmul.f32 %v848, %v855
        %v863 = vmul.f32 %v849, %v859
        %864 = vst [vmem:[#allocation4] sm:$0xff] %v862
        %865 = vst [vmem:[#allocation4 + $0x8] sm:$0xff] %v863
        %v866 = vld [vmem:[#allocation3] sm:$0xff]
        %v867 = vld [vmem:[#allocation3 + $0x8] sm:$0xff]
        %v868 = vld [vmem:[#allocation3 + $0x10] sm:$0xff]
        %v869 = vld [vmem:[%s368] ss:$8 sm:$0x3]
        %v871 = vlaneseq
        %v872 = vshrl.u32 %v871, 7
        %v873 = vsub.s32 0, %v872
        %v874 = vrot.slane %v869, %v873
        %v875 = vlaneseq
        %v876 = vshrl.u32 %v875, 7
        %v877 = vsub.s32 1, %v876
        %v878 = vrot.slane %v869, %v877
        %879 = vrot.lane.b32.xlu0 %v874, 1
        %v880 = vpop.permute.xlu0 %879
        %881 = vrot.lane.b32.xlu0 %v878, 1
        %v882 = vpop.permute.xlu0 %881
        %v883 = vsel %vm383, %v880, %v882
        %v887 = vmul.f32 %v866, %v880
        %v888 = vmul.f32 %v867, %v883
        %v889 = vmul.f32 %v868, %v882
        %893 = vrot.lane.b32.xlu0 %v887, 127
        %v894 = vpop.permute.xlu0 %893
        %895 = vrot.lane.b32.xlu0 %v888, 127
        %v896 = vpop.permute.xlu0 %895
        %897 = vrot.lane.b32.xlu0 %v889, 127
        %v898 = vpop.permute.xlu0 %897
        %v899 = vsel %vm403, %v894, %v896
        %v900 = vsel %vm403, %v896, %v898
        %903 = vst [vmem:[#allocation4 + $0x10] sm:$0xff] %v899
        %904 = vst [vmem:[#allocation4 + $0x18] sm:$0xff] %v900
        %v905 = vld [vmem:[#allocation3] sm:$0xff]
        %v906 = vld [vmem:[#allocation3 + $0x8] sm:$0xff]
        %v907 = vld [vmem:[#allocation3 + $0x10] sm:$0xff]
        %v908 = vld [vmem:[%s413] ss:$8 sm:$0x3]
        %v910 = vlaneseq
        %v911 = vshrl.u32 %v910, 7
        %v912 = vsub.s32 0, %v911
        %v913 = vrot.slane %v908, %v912
        %v914 = vlaneseq
        %v915 = vshrl.u32 %v914, 7
        %v916 = vsub.s32 1, %v915
        %v917 = vrot.slane %v908, %v916
        %918 = vrot.lane.b32.xlu0 %v913, 2
        %v919 = vpop.permute.xlu0 %918
        %920 = vrot.lane.b32.xlu0 %v917, 2
        %v921 = vpop.permute.xlu0 %920
        %v922 = vsel %vm428, %v919, %v921
        %v926 = vmul.f32 %v905, %v919
        %v927 = vmul.f32 %v906, %v922
        %v928 = vmul.f32 %v907, %v921
        %932 = vrot.lane.b32.xlu0 %v926, 126
        %v933 = vpop.permute.xlu0 %932
        %934 = vrot.lane.b32.xlu0 %v927, 126
        %v935 = vpop.permute.xlu0 %934
        %936 = vrot.lane.b32.xlu0 %v928, 126
        %v937 = vpop.permute.xlu0 %936
        %v938 = vsel %vm445, %v933, %v935
        %v939 = vsel %vm445, %v935, %v937
        %942 = vst [vmem:[#allocation4 + $0x20] sm:$0xff] %v938
        %943 = vst [vmem:[#allocation4 + $0x28] sm:$0xff] %v939
        %v944 = vld [vmem:[#allocation3] sm:$0xff]
        %v945 = vld [vmem:[#allocation3 + $0x8] sm:$0xff]
        %v946 = vld [vmem:[#allocation3 + $0x10] sm:$0xff]
        %v947 = vld [vmem:[%s455] ss:$8 sm:$0x3]
        %v949 = vlaneseq
        %v950 = vshrl.u32 %v949, 7
        %v951 = vsub.s32 0, %v950
        %v952 = vrot.slane %v947, %v951
        %v953 = vlaneseq
        %v954 = vshrl.u32 %v953, 7
        %v955 = vsub.s32 1, %v954
        %v956 = vrot.slane %v947, %v955
        %957 = vrot.lane.b32.xlu0 %v952, 16
        %v958 = vpop.permute.xlu0 %957
        %959 = vrot.lane.b32.xlu0 %v956, 16
        %v960 = vpop.permute.xlu0 %959
        %v961 = vsel %vm470, %v958, %v960
        %v965 = vmul.f32 %v944, %v958
        %v966 = vmul.f32 %v945, %v961
        %v967 = vmul.f32 %v946, %v960
        %971 = vrot.lane.b32.xlu0 %v965, 112
        %v972 = vpop.permute.xlu0 %971
        %973 = vrot.lane.b32.xlu0 %v966, 112
        %v974 = vpop.permute.xlu0 %973
        %975 = vrot.lane.b32.xlu0 %v967, 112
        %v976 = vpop.permute.xlu0 %975
        %v977 = vsel %vm490, %v972, %v974
        %v978 = vsel %vm490, %v974, %v976
        %981 = vst [vmem:[#allocation4 + $0x30] sm:$0xff] %v977
        %982 = vst [vmem:[#allocation4 + $0x38] sm:$0xff] %v978
        %v983 = vld [vmem:[#allocation3] sm:$0xff]
        %v984 = vld [vmem:[#allocation3 + $0x8] sm:$0xff]
        %v985 = vld [vmem:[#allocation3 + $0x10] sm:$0xff]
        %v986 = vld [vmem:[%s500] ss:$8 sm:$0x3]
        %v988 = vlaneseq
        %v989 = vshrl.u32 %v988, 7
        %v990 = vsub.s32 0, %v989
        %v991 = vrot.slane %v986, %v990
        %v992 = vlaneseq
        %v993 = vshrl.u32 %v992, 7
        %v994 = vsub.s32 1, %v993
        %v995 = vrot.slane %v986, %v994
        %996 = vrot.lane.b32.xlu0 %v991, 17
        %v997 = vpop.permute.xlu0 %996
        %998 = vrot.lane.b32.xlu0 %v995, 17
        %v999 = vpop.permute.xlu0 %998
        %v1000 = vsel %vm337, %v997, %v999
        %v1004 = vmul.f32 %v983, %v997
        %v1005 = vmul.f32 %v984, %v1000
        %v1006 = vmul.f32 %v985, %v999
        %1010 = vrot.lane.b32.xlu0 %v1004, 111
        %v1011 = vpop.permute.xlu0 %1010
        %1012 = vrot.lane.b32.xlu0 %v1005, 111
        %v1013 = vpop.permute.xlu0 %1012
        %1014 = vrot.lane.b32.xlu0 %v1006, 111
        %v1015 = vpop.permute.xlu0 %1014
        %v1016 = vsel %vm531, %v1011, %v1013
        %v1017 = vsel %vm531, %v1013, %v1015
        %1020 = vst [vmem:[#allocation4 + $0x40] sm:$0xff] %v1016
        %1021 = vst [vmem:[#allocation4 + $0x48] sm:$0xff] %v1017
        %v1022 = vld [vmem:[#allocation3] sm:$0xff]
        %v1023 = vld [vmem:[#allocation3 + $0x8] sm:$0xff]
        %v1024 = vld [vmem:[#allocation3 + $0x10] sm:$0xff]
        %v1025 = vld [vmem:[%s541] ss:$8 sm:$0x3]
        %v1027 = vlaneseq
        %v1028 = vshrl.u32 %v1027, 7
        %v1029 = vsub.s32 0, %v1028
        %v1030 = vrot.slane %v1025, %v1029
        %v1031 = vlaneseq
        %v1032 = vshrl.u32 %v1031, 7
        %v1033 = vsub.s32 1, %v1032
        %v1034 = vrot.slane %v1025, %v1033
        %1035 = vrot.lane.b32.xlu0 %v1030, 18
        %v1036 = vpop.permute.xlu0 %1035
        %1037 = vrot.lane.b32.xlu0 %v1034, 18
        %v1038 = vpop.permute.xlu0 %1037
        %v1039 = vsel %vm556, %v1036, %v1038
        %v1043 = vmul.f32 %v1022, %v1036
        %v1044 = vmul.f32 %v1023, %v1039
        %v1045 = vmul.f32 %v1024, %v1038
        %1049 = vrot.lane.b32.xlu0 %v1043, 110
        %v1050 = vpop.permute.xlu0 %1049
        %1051 = vrot.lane.b32.xlu0 %v1044, 110
        %v1052 = vpop.permute.xlu0 %1051
        %1053 = vrot.lane.b32.xlu0 %v1045, 110
        %v1054 = vpop.permute.xlu0 %1053
        %v1055 = vsel %vm576, %v1050, %v1052
        %v1056 = vsel %vm576, %v1052, %v1054
        %1059 = vst [vmem:[#allocation4 + $0x50] sm:$0xff] %v1055
        %1060 = vst [vmem:[#allocation4 + $0x58] sm:$0xff] %v1056
        %v1061 = vld [vmem:[#allocation3] sm:$0xff]
        %v1062 = vld [vmem:[#allocation3 + $0x8] sm:$0xff]
        %v1063 = vld [vmem:[#allocation3 + $0x10] sm:$0xff]
        %v1064 = vld [vmem:[%s586] ss:$8 sm:$0x3]
        %v1066 = vlaneseq
        %v1067 = vshrl.u32 %v1066, 7
        %v1068 = vsub.s32 0, %v1067
        %v1069 = vrot.slane %v1064, %v1068
        %v1070 = vlaneseq
        %v1071 = vshrl.u32 %v1070, 7
        %v1072 = vsub.s32 1, %v1071
        %v1073 = vrot.slane %v1064, %v1072
        %1074 = vrot.lane.b32.xlu0 %v1069, 32
        %v1075 = vpop.permute.xlu0 %1074
        %1076 = vrot.lane.b32.xlu0 %v1073, 32
        %v1077 = vpop.permute.xlu0 %1076
        %v1078 = vsel %vm601, %v1075, %v1077
        %v1082 = vmul.f32 %v1061, %v1075
        %v1083 = vmul.f32 %v1062, %v1078
        %v1084 = vmul.f32 %v1063, %v1077
        %1088 = vrot.lane.b32.xlu0 %v1082, 96
        %v1089 = vpop.permute.xlu0 %1088
        %1090 = vrot.lane.b32.xlu0 %v1083, 96
        %v1091 = vpop.permute.xlu0 %1090
        %1092 = vrot.lane.b32.xlu0 %v1084, 96
        %v1093 = vpop.permute.xlu0 %1092
        %v1094 = vsel %vm618, %v1089, %v1091
        %v1095 = vsel %vm618, %v1091, %v1093
        %1098 = vst [vmem:[#allocation4 + $0x60] sm:$0xff] %v1094
        %1099 = vst [vmem:[#allocation4 + $0x68] sm:$0xff] %v1095
        %v1100 = vld [vmem:[#allocation3] sm:$0xff]
        %v1101 = vld [vmem:[#allocation3 + $0x8] sm:$0xff]
        %v1102 = vld [vmem:[#allocation3 + $0x10] sm:$0xff]
        %v1103 = vld [vmem:[%s628] ss:$8 sm:$0x3]
        %v1105 = vlaneseq
        %v1106 = vshrl.u32 %v1105, 7
        %v1107 = vsub.s32 0, %v1106
        %v1108 = vrot.slane %v1103, %v1107
        %v1109 = vlaneseq
        %v1110 = vshrl.u32 %v1109, 7
        %v1111 = vsub.s32 1, %v1110
        %v1112 = vrot.slane %v1103, %v1111
        %1113 = vrot.lane.b32.xlu0 %v1108, 33
        %v1114 = vpop.permute.xlu0 %1113
        %1115 = vrot.lane.b32.xlu0 %v1112, 33
        %v1116 = vpop.permute.xlu0 %1115
        %v1117 = vsel %vm643, %v1114, %v1116
        %v1121 = vmul.f32 %v1100, %v1114
        %v1122 = vmul.f32 %v1101, %v1117
        %v1123 = vmul.f32 %v1102, %v1116
        %1127 = vrot.lane.b32.xlu0 %v1121, 95
        %v1128 = vpop.permute.xlu0 %1127
        %1129 = vrot.lane.b32.xlu0 %v1122, 95
        %v1130 = vpop.permute.xlu0 %1129
        %1131 = vrot.lane.b32.xlu0 %v1123, 95
        %v1132 = vpop.permute.xlu0 %1131
        %v1133 = vsel %vm663, %v1128, %v1130
        %v1134 = vsel %vm663, %v1130, %v1132
        %1137 = vst [vmem:[#allocation4 + $0x70] sm:$0xff] %v1133
        %1138 = vst [vmem:[#allocation4 + $0x78] sm:$0xff] %v1134
        %v1139 = vld [vmem:[#allocation3] sm:$0xff]
        %v1140 = vld [vmem:[#allocation3 + $0x8] sm:$0xff]
        %v1141 = vld [vmem:[#allocation3 + $0x10] sm:$0xff]
        %v1142 = vld [vmem:[%s673] ss:$8 sm:$0x3]
        %v1144 = vlaneseq
        %v1145 = vshrl.u32 %v1144, 7
        %v1146 = vsub.s32 0, %v1145
        %v1147 = vrot.slane %v1142, %v1146
        %v1148 = vlaneseq
        %v1149 = vshrl.u32 %v1148, 7
        %v1150 = vsub.s32 1, %v1149
        %v1151 = vrot.slane %v1142, %v1150
        %1152 = vrot.lane.b32.xlu0 %v1147, 34
        %v1153 = vpop.permute.xlu0 %1152
        %1154 = vrot.lane.b32.xlu0 %v1151, 34
        %v1155 = vpop.permute.xlu0 %1154
        %v1156 = vsel %vm299, %v1153, %v1155
        %v1160 = vmul.f32 %v1139, %v1153
        %v1161 = vmul.f32 %v1140, %v1156
        %v1162 = vmul.f32 %v1141, %v1155
        %1166 = vrot.lane.b32.xlu0 %v1160, 94
        %v1167 = vpop.permute.xlu0 %1166
        %1168 = vrot.lane.b32.xlu0 %v1161, 94
        %v1169 = vpop.permute.xlu0 %1168
        %1170 = vrot.lane.b32.xlu0 %v1162, 94
        %v1171 = vpop.permute.xlu0 %1170
        %v1172 = vsel %vm704, %v1167, %v1169
        %v1173 = vsel %vm704, %v1169, %v1171
        %1176 = vst [vmem:[#allocation4 + $0x80] sm:$0xff] %v1172
        %1177 = vst [vmem:[#allocation4 + $0x88] sm:$0xff] %v1173
        %v1178 = vld [vmem:[%s5] sm:$0xf]
        %v1179 = vld [vmem:[#allocation4] sm:$0xff]
        %v1180 = vld [vmem:[#allocation4 + $0x8] sm:$0xff]
        %v1181 = vld [vmem:[#allocation4 + $0x10] sm:$0xff]
        %v1182 = vld [vmem:[#allocation4 + $0x18] sm:$0xff]
        %v1183 = vld [vmem:[#allocation4 + $0x20] sm:$0xff]
        %v1184 = vld [vmem:[#allocation4 + $0x28] sm:$0xff]
        %v1185 = vld [vmem:[#allocation4 + $0x30] sm:$0xff]
        %v1186 = vld [vmem:[#allocation4 + $0x38] sm:$0xff]
        %v1187 = vld [vmem:[#allocation4 + $0x40] sm:$0xff]
        %v1188 = vld [vmem:[#allocation4 + $0x48] sm:$0xff]
        %v1189 = vld [vmem:[#allocation4 + $0x50] sm:$0xff]
        %v1190 = vld [vmem:[#allocation4 + $0x58] sm:$0xff]
        %v1191 = vld [vmem:[#allocation4 + $0x60] sm:$0xff]
        %v1192 = vld [vmem:[#allocation4 + $0x68] sm:$0xff]
        %v1193 = vld [vmem:[#allocation4 + $0x70] sm:$0xff]
        %v1194 = vld [vmem:[#allocation4 + $0x78] sm:$0xff]
        %v1195 = vld [vmem:[#allocation4 + $0x80] sm:$0xff]
        %v1196 = vld [vmem:[#allocation4 + $0x88] sm:$0xff]
        %vm1197 = vcmask 588800
        %v1199 = vsel %vm1197, %v1178, 0
        %1201 = vmatprep.subr.mxu0 %v1180
        %1202 = vmatpush1.msra.mxu0 %v1179
        %1203 = vmatprep.subr.mxu0 %v1182
        %1204 = vmatpush1.msra.mxu0 %v1181
        %1205 = vmatprep.subr.mxu0 %v1184
        %1206 = vmatpush1.msra.mxu0 %v1183
        %1207 = vmatprep.subr.mxu0 %v1186
        %1208 = vmatpush1.msra.mxu0 %v1185
        %1209 = vmatprep.subr.mxu0 %v1188
        %1210 = vmatpush1.msra.mxu0 %v1187
        %1211 = vmatprep.subr.mxu0 %v1190
        %1212 = vmatpush1.msra.mxu0 %v1189
        %1213 = vmatprep.subr.mxu0 %v1192
        %1214 = vmatpush1.msra.mxu0 %v1191
        %1215 = vmatprep.subr.mxu0 %v1194
        %1216 = vmatpush1.msra.mxu0 %v1193
        %1217 = vmatprep.subr.mxu0 %v1196
        %1218 = vmatpush1.msra.mxu0 %v1195
        %1219 = vmatprep.subr.mxu0 0.0
        %1220 = vmatpush1.msra.mxu0 0.0
        %1221 = vmatprep.subr.mxu0 0.0
        %1222 = vmatpush1.msra.mxu0 0.0
        %1223 = vmatprep.subr.mxu0 0.0
        %1224 = vmatpush1.msra.mxu0 0.0
        %1225 = vmatprep.subr.mxu0 0.0
        %1226 = vmatpush1.msra.mxu0 0.0
        %1227 = vmatprep.subr.mxu0 0.0
        %1228 = vmatpush1.msra.mxu0 0.0
        %1229 = vmatprep.subr.mxu0 0.0
        %1230 = vmatpush1.msra.mxu0 0.0
        %1231 = vmatprep.subr.mxu0 0.0
        %1232 = vmatpush1.msra.mxu0 0.0
        %1233 = vmatprep.subr.mxu0 0.0
        %1234 = vmatpush1.msra.mxu0 0.0
        %1235 = vmatprep.subr.mxu0 0.0
        %1236 = vmatpush1.msra.mxu0 0.0
        %1237 = vmatprep.subr.mxu0 0.0
        %1238 = vmatpush1.msra.mxu0 0.0
        %1239 = vmatprep.subr.mxu0 0.0
        %1240 = vmatpush1.msra.mxu0 0.0
        %1241 = vmatprep.subr.mxu0 0.0
        %1242 = vmatpush1.msra.mxu0 0.0
        %1243 = vmatprep.subr.mxu0 0.0
        %1244 = vmatpush1.msra.mxu0 0.0
        %1245 = vmatprep.subr.mxu0 0.0
        %1246 = vmatpush1.msra.mxu0 0.0
        %1247 = vmatprep.subr.mxu0 0.0
        %1248 = vmatpush1.msra.mxu0 0.0
        %1249 = vmatprep.subr.mxu0 0.0
        %1250 = vmatpush1.msra.mxu0 0.0
        %1251 = vmatprep.subr.mxu0 0.0
        %1252 = vmatpush1.msra.mxu0 0.0
        %1253 = vmatprep.subr.mxu0 0.0
        %1254 = vmatpush1.msra.mxu0 0.0
        %1255 = vmatprep.subr.mxu0 0.0
        %1256 = vmatpush1.msra.mxu0 0.0
        %1257 = vmatprep.subr.mxu0 0.0
        %1258 = vmatpush1.msra.mxu0 0.0
        %1259 = vmatprep.subr.mxu0 0.0
        %1260 = vmatpush1.msra.mxu0 0.0
        %1261 = vmatprep.subr.mxu0 0.0
        %1262 = vmatpush1.msra.mxu0 0.0
        %1263 = vmatprep.subr.mxu0 0.0
        %1264 = vmatpush1.msra.mxu0 0.0
        %1265 = vmatprep.mubr.f32.mxu0 0.0
        %1266 = vmatmul.mubr.f32.gmra.mrb[0].mxu0 %v1199
        %v1267 = vpop.f32.mrb[0].mxu0
        %v1268 = vadd.f32 0.0, %v1267
        %v1269 = vpop.f32.mrb[0].mxu0
        %v1270 = vadd.f32 0.0, %v1269
        %1271 = vdwg.mxu0
        %1272 = vst [vmem:[#allocation2 + $0x10] sm:$0xf] %v1268
        %1273 = vst [vmem:[#allocation2 + $0x18] sm:$0xf] %v1270
        %v1276 = vrot.slane %v1268, 4
        %v1277 = vrot.slane %v1270, 4
        %1280 = vst [vmem:[%s296] sm:$0xf0] %v1276
        %1281 = vst [vmem:[%s296 + $0x8] sm:$0xf0] %v1277
        %v1282 = vld [vmem:[#allocation2] sm:$0xff]
        %v1283 = vld [vmem:[#allocation2 + $0x8] sm:$0xff]
        %v1284 = vld [vmem:[#allocation2 + $0x10] sm:$0xf]
        %v1285 = vld [vmem:[#allocation2 + $0x18] sm:$0xf]
        %v1286 = vld [vmem:[%s2] sm:$0xff]
        %v1287 = vld [vmem:[%s2 + $0x8] sm:$0xf]
        %v1288 = vld [vmem:[%s3] sm:$0xff]
        %v1289 = vld [vmem:[%s3 + $0x8] sm:$0xf]
        %1291 = vset.pattern.permute.xlu0 2
        %1292 = vperm.xlu0 %1291, %v1286
        %v1293 = vpop.permute.xlu0 %1292
        %1296 = vset.pattern.permute.xlu0 2
        %1297 = vperm.xlu0 %1296, %v1287
        %v1298 = vpop.permute.xlu0 %1297
        %v1300 = vmul.f32 %v1282, %v1293
        %v1301 = vmul.f32 %v1283, %v1293
        %v1302 = vmul.f32 %v1284, %v1298
        %v1303 = vmul.f32 %v1285, %v1298
        %1305 = vset.pattern.permute.xlu0 2
        %1306 = vperm.xlu0 %1305, %v1288
        %v1307 = vpop.permute.xlu0 %1306
        %1310 = vset.pattern.permute.xlu0 2
        %1311 = vperm.xlu0 %1310, %v1289
        %v1312 = vpop.permute.xlu0 %1311
        %v1314 = vadd.f32 %v1300, %v1307
        %v1315 = vadd.f32 %v1301, %v1307
        %v1316 = vadd.f32 %v1302, %v1312
        %v1317 = vadd.f32 %v1303, %v1312
        %v1318 = vmax.f32 %v1314, 0.0
        %v1319 = vmax.f32 %v1315, 0.0
        %v1320 = vmax.f32 %v1316, 0.0
        %v1321 = vmax.f32 %v1317, 0.0
        %1326 = vrot.lane.b32.xlu0 %v1318, 17
        %v1327 = vpop.permute.xlu0 %1326
        %1328 = vrot.lane.b32.xlu0 %v1319, 17
        %v1329 = vpop.permute.xlu0 %1328
        %1330 = vrot.lane.b32.xlu0 %v1320, 17
        %v1331 = vpop.permute.xlu0 %1330
        %1332 = vrot.lane.b32.xlu0 %v1321, 17
        %v1333 = vpop.permute.xlu0 %1332
        %v1334 = vsel %vm337, %v1327, %v1329
        %v1335 = vsel %vm337, %v1331, %v1333
        %1342 = vst.msk [vmem:[#allocation3] sm:$0xff] %vm844, %v1327
        %1343 = vst [vmem:[#allocation3 + $0x8] sm:$0xff] %v1334
        %1344 = vst.msk [vmem:[#allocation3 + $0x10] sm:$0xff] %vm337, %v1329
        %1345 = vst.msk [vmem:[#allocation3 + $0x18] sm:$0xf] %vm342, %v1331
        %1346 = vst [vmem:[#allocation3 + $0x20] sm:$0xf] %v1335
        %1347 = vst.msk [vmem:[#allocation3 + $0x28] sm:$0xf] %vm345, %v1333
        %v1348 = vld [vmem:[#allocation3] sm:$0xff]
        %v1349 = vld [vmem:[#allocation3 + $0x8] sm:$0xff]
        %v1350 = vld [vmem:[#allocation3 + $0x18] sm:$0xf]
        %v1351 = vld [vmem:[#allocation3 + $0x20] sm:$0xf]
        %v1352 = vld [vmem:[%s1] ss:$8 sm:$0x3]
        %v1354 = vlaneseq
        %v1355 = vshrl.u32 %v1354, 7
        %v1356 = vsub.s32 0, %v1355
        %v1357 = vrot.slane %v1352, %v1356
        %v1358 = vlaneseq
        %v1359 = vshrl.u32 %v1358, 7
        %v1360 = vsub.s32 1, %v1359
        %v1361 = vrot.slane %v1352, %v1360
        %v1364 = vmul.f32 %v1348, %v1357
        %v1365 = vmul.f32 %v1349, %v1361
        %v1366 = vmul.f32 %v1350, %v1357
        %v1367 = vmul.f32 %v1351, %v1361
        %1368 = vst [vmem:[#allocation4] sm:$0xff] %v1364
        %1369 = vst [vmem:[#allocation4 + $0x8] sm:$0xff] %v1365
        %1370 = vst [vmem:[#allocation4 + $0x10] sm:$0xf] %v1366
        %1371 = vst [vmem:[#allocation4 + $0x18] sm:$0xf] %v1367
        %v1372 = vld [vmem:[#allocation3] sm:$0xff]
        %v1373 = vld [vmem:[#allocation3 + $0x8] sm:$0xff]
        %v1374 = vld [vmem:[#allocation3 + $0x10] sm:$0xff]
        %v1375 = vld [vmem:[#allocation3 + $0x18] sm:$0xf]
        %v1376 = vld [vmem:[#allocation3 + $0x20] sm:$0xf]
        %v1377 = vld [vmem:[#allocation3 + $0x28] sm:$0xf]
        %v1378 = vld [vmem:[%s368] ss:$8 sm:$0x3]
        %v1380 = vlaneseq
        %v1381 = vshrl.u32 %v1380, 7
        %v1382 = vsub.s32 0, %v1381
        %v1383 = vrot.slane %v1378, %v1382
        %v1384 = vlaneseq
        %v1385 = vshrl.u32 %v1384, 7
        %v1386 = vsub.s32 1, %v1385
        %v1387 = vrot.slane %v1378, %v1386
        %1388 = vrot.lane.b32.xlu0 %v1383, 1
        %v1389 = vpop.permute.xlu0 %1388
        %1390 = vrot.lane.b32.xlu0 %v1387, 1
        %v1391 = vpop.permute.xlu0 %1390
        %v1392 = vsel %vm383, %v1389, %v1391
        %v1396 = vmul.f32 %v1372, %v1389
        %v1397 = vmul.f32 %v1373, %v1392
        %v1398 = vmul.f32 %v1374, %v1391
        %v1399 = vmul.f32 %v1375, %v1389
        %v1400 = vmul.f32 %v1376, %v1392
        %v1401 = vmul.f32 %v1377, %v1391
        %v1408 = vrot.slane %v1396, 4
        %v1409 = vrot.slane %v1397, 4
        %v1410 = vrot.slane %v1398, 4
        %v1411 = vrot.slane %v1399, 4
        %v1412 = vsel %vm726, %v1408, %v1411
        %v1413 = vrot.slane %v1400, 4
        %v1414 = vsel %vm726, %v1409, %v1413
        %v1415 = vrot.slane %v1401, 4
        %v1416 = vsel %vm726, %v1410, %v1415
        %1417 = vrot.lane.b32.xlu0 %v1408, 127
        %v1418 = vpop.permute.xlu0 %1417
        %1419 = vrot.lane.b32.xlu0 %v1409, 127
        %v1420 = vpop.permute.xlu0 %1419
        %1421 = vrot.lane.b32.xlu0 %v1410, 127
        %v1422 = vpop.permute.xlu0 %1421
        %1423 = vrot.lane.b32.xlu0 %v1412, 127
        %v1424 = vpop.permute.xlu0 %1423
        %1425 = vrot.lane.b32.xlu0 %v1414, 127
        %v1426 = vpop.permute.xlu0 %1425
        %1427 = vrot.lane.b32.xlu0 %v1416, 127
        %v1428 = vpop.permute.xlu0 %1427
        %v1429 = vsel %vm403, %v1418, %v1420
        %v1430 = vsel %vm403, %v1420, %v1422
        %v1431 = vsel %vm403, %v1424, %v1426
        %v1432 = vsel %vm403, %v1426, %v1428
        %1437 = vst [vmem:[#allocation4 + $0x10] sm:$0xf0] %v1429
        %1438 = vst [vmem:[#allocation4 + $0x18] sm:$0xf0] %v1430
        %1439 = vst [vmem:[#allocation4 + $0x20] sm:$0xff] %v1431
        %1440 = vst [vmem:[#allocation4 + $0x28] sm:$0xff] %v1432
        %v1441 = vld [vmem:[#allocation3] sm:$0xff]
        %v1442 = vld [vmem:[#allocation3 + $0x8] sm:$0xff]
        %v1443 = vld [vmem:[#allocation3 + $0x10] sm:$0xff]
        %v1444 = vld [vmem:[#allocation3 + $0x18] sm:$0xf]
        %v1445 = vld [vmem:[#allocation3 + $0x20] sm:$0xf]
        %v1446 = vld [vmem:[#allocation3 + $0x28] sm:$0xf]
        %v1447 = vld [vmem:[%s413] ss:$8 sm:$0x3]
        %v1449 = vlaneseq
        %v1450 = vshrl.u32 %v1449, 7
        %v1451 = vsub.s32 0, %v1450
        %v1452 = vrot.slane %v1447, %v1451
        %v1453 = vlaneseq
        %v1454 = vshrl.u32 %v1453, 7
        %v1455 = vsub.s32 1, %v1454
        %v1456 = vrot.slane %v1447, %v1455
        %1457 = vrot.lane.b32.xlu0 %v1452, 2
        %v1458 = vpop.permute.xlu0 %1457
        %1459 = vrot.lane.b32.xlu0 %v1456, 2
        %v1460 = vpop.permute.xlu0 %1459
        %v1461 = vsel %vm428, %v1458, %v1460
        %v1465 = vmul.f32 %v1441, %v1458
        %v1466 = vmul.f32 %v1442, %v1461
        %v1467 = vmul.f32 %v1443, %v1460
        %v1468 = vmul.f32 %v1444, %v1458
        %v1469 = vmul.f32 %v1445, %v1461
        %v1470 = vmul.f32 %v1446, %v1460
        %1477 = vrot.lane.b32.xlu0 %v1465, 126
        %v1478 = vpop.permute.xlu0 %1477
        %1479 = vrot.lane.b32.xlu0 %v1466, 126
        %v1480 = vpop.permute.xlu0 %1479
        %1481 = vrot.lane.b32.xlu0 %v1467, 126
        %v1482 = vpop.permute.xlu0 %1481
        %1483 = vrot.lane.b32.xlu0 %v1468, 126
        %v1484 = vpop.permute.xlu0 %1483
        %1485 = vrot.lane.b32.xlu0 %v1469, 126
        %v1486 = vpop.permute.xlu0 %1485
        %1487 = vrot.lane.b32.xlu0 %v1470, 126
        %v1488 = vpop.permute.xlu0 %1487
        %v1489 = vsel %vm445, %v1478, %v1480
        %v1490 = vsel %vm445, %v1480, %v1482
        %v1491 = vsel %vm445, %v1484, %v1486
        %v1492 = vsel %vm445, %v1486, %v1488
        %1497 = vst [vmem:[#allocation4 + $0x30] sm:$0xff] %v1489
        %1498 = vst [vmem:[#allocation4 + $0x38] sm:$0xff] %v1490
        %1499 = vst [vmem:[#allocation4 + $0x40] sm:$0xf] %v1491
        %1500 = vst [vmem:[#allocation4 + $0x48] sm:$0xf] %v1492
        %v1501 = vld [vmem:[#allocation3] sm:$0xff]
        %v1502 = vld [vmem:[#allocation3 + $0x8] sm:$0xff]
        %v1503 = vld [vmem:[#allocation3 + $0x10] sm:$0xff]
        %v1504 = vld [vmem:[#allocation3 + $0x18] sm:$0xf]
        %v1505 = vld [vmem:[#allocation3 + $0x20] sm:$0xf]
        %v1506 = vld [vmem:[#allocation3 + $0x28] sm:$0xf]
        %v1507 = vld [vmem:[%s455] ss:$8 sm:$0x3]
        %v1509 = vlaneseq
        %v1510 = vshrl.u32 %v1509, 7
        %v1511 = vsub.s32 0, %v1510
        %v1512 = vrot.slane %v1507, %v1511
        %v1513 = vlaneseq
        %v1514 = vshrl.u32 %v1513, 7
        %v1515 = vsub.s32 1, %v1514
        %v1516 = vrot.slane %v1507, %v1515
        %1517 = vrot.lane.b32.xlu0 %v1512, 16
        %v1518 = vpop.permute.xlu0 %1517
        %1519 = vrot.lane.b32.xlu0 %v1516, 16
        %v1520 = vpop.permute.xlu0 %1519
        %v1521 = vsel %vm470, %v1518, %v1520
        %v1525 = vmul.f32 %v1501, %v1518
        %v1526 = vmul.f32 %v1502, %v1521
        %v1527 = vmul.f32 %v1503, %v1520
        %v1528 = vmul.f32 %v1504, %v1518
        %v1529 = vmul.f32 %v1505, %v1521
        %v1530 = vmul.f32 %v1506, %v1520
        %v1537 = vrot.slane %v1525, 4
        %v1538 = vrot.slane %v1526, 4
        %v1539 = vrot.slane %v1527, 4
        %v1540 = vrot.slane %v1528, 4
        %v1541 = vsel %vm726, %v1537, %v1540
        %v1542 = vrot.slane %v1529, 4
        %v1543 = vsel %vm726, %v1538, %v1542
        %v1544 = vrot.slane %v1530, 4
        %v1545 = vsel %vm726, %v1539, %v1544
        %1546 = vrot.lane.b32.xlu0 %v1537, 112
        %v1547 = vpop.permute.xlu0 %1546
        %1548 = vrot.lane.b32.xlu0 %v1538, 112
        %v1549 = vpop.permute.xlu0 %1548
        %1550 = vrot.lane.b32.xlu0 %v1539, 112
        %v1551 = vpop.permute.xlu0 %1550
        %1552 = vrot.lane.b32.xlu0 %v1541, 112
        %v1553 = vpop.permute.xlu0 %1552
        %1554 = vrot.lane.b32.xlu0 %v1543, 112
        %v1555 = vpop.permute.xlu0 %1554
        %1556 = vrot.lane.b32.xlu0 %v1545, 112
        %v1557 = vpop.permute.xlu0 %1556
        %v1558 = vsel %vm490, %v1547, %v1549
        %v1559 = vsel %vm490, %v1549, %v1551
        %v1560 = vsel %vm490, %v1553, %v1555
        %v1561 = vsel %vm490, %v1555, %v1557
        %1566 = vst [vmem:[#allocation4 + $0x40] sm:$0xf0] %v1558
        %1567 = vst [vmem:[#allocation4 + $0x48] sm:$0xf0] %v1559
        %1568 = vst [vmem:[#allocation4 + $0x50] sm:$0xff] %v1560
        %1569 = vst [vmem:[#allocation4 + $0x58] sm:$0xff] %v1561
        %v1570 = vld [vmem:[#allocation3] sm:$0xff]
        %v1571 = vld [vmem:[#allocation3 + $0x8] sm:$0xff]
        %v1572 = vld [vmem:[#allocation3 + $0x10] sm:$0xff]
        %v1573 = vld [vmem:[#allocation3 + $0x18] sm:$0xf]
        %v1574 = vld [vmem:[#allocation3 + $0x20] sm:$0xf]
        %v1575 = vld [vmem:[#allocation3 + $0x28] sm:$0xf]
        %v1576 = vld [vmem:[%s500] ss:$8 sm:$0x3]
        %v1578 = vlaneseq
        %v1579 = vshrl.u32 %v1578, 7
        %v1580 = vsub.s32 0, %v1579
        %v1581 = vrot.slane %v1576, %v1580
        %v1582 = vlaneseq
        %v1583 = vshrl.u32 %v1582, 7
        %v1584 = vsub.s32 1, %v1583
        %v1585 = vrot.slane %v1576, %v1584
        %1586 = vrot.lane.b32.xlu0 %v1581, 17
        %v1587 = vpop.permute.xlu0 %1586
        %1588 = vrot.lane.b32.xlu0 %v1585, 17
        %v1589 = vpop.permute.xlu0 %1588
        %v1590 = vsel %vm337, %v1587, %v1589
        %v1594 = vmul.f32 %v1570, %v1587
        %v1595 = vmul.f32 %v1571, %v1590
        %v1596 = vmul.f32 %v1572, %v1589
        %v1597 = vmul.f32 %v1573, %v1587
        %v1598 = vmul.f32 %v1574, %v1590
        %v1599 = vmul.f32 %v1575, %v1589
        %1606 = vrot.lane.b32.xlu0 %v1594, 111
        %v1607 = vpop.permute.xlu0 %1606
        %1608 = vrot.lane.b32.xlu0 %v1595, 111
        %v1609 = vpop.permute.xlu0 %1608
        %1610 = vrot.lane.b32.xlu0 %v1596, 111
        %v1611 = vpop.permute.xlu0 %1610
        %1612 = vrot.lane.b32.xlu0 %v1597, 111
        %v1613 = vpop.permute.xlu0 %1612
        %1614 = vrot.lane.b32.xlu0 %v1598, 111
        %v1615 = vpop.permute.xlu0 %1614
        %1616 = vrot.lane.b32.xlu0 %v1599, 111
        %v1617 = vpop.permute.xlu0 %1616
        %v1618 = vsel %vm531, %v1607, %v1609
        %v1619 = vsel %vm531, %v1609, %v1611
        %v1620 = vsel %vm531, %v1613, %v1615
        %v1621 = vsel %vm531, %v1615, %v1617
        %1626 = vst [vmem:[#allocation4 + $0x60] sm:$0xff] %v1618
        %1627 = vst [vmem:[#allocation4 + $0x68] sm:$0xff] %v1619
        %1628 = vst [vmem:[#allocation4 + $0x70] sm:$0xf] %v1620
        %1629 = vst [vmem:[#allocation4 + $0x78] sm:$0xf] %v1621
        %v1630 = vld [vmem:[#allocation3] sm:$0xff]
        %v1631 = vld [vmem:[#allocation3 + $0x8] sm:$0xff]
        %v1632 = vld [vmem:[#allocation3 + $0x10] sm:$0xff]
        %v1633 = vld [vmem:[#allocation3 + $0x18] sm:$0xf]
        %v1634 = vld [vmem:[#allocation3 + $0x20] sm:$0xf]
        %v1635 = vld [vmem:[#allocation3 + $0x28] sm:$0xf]
        %v1636 = vld [vmem:[%s541] ss:$8 sm:$0x3]
        %v1638 = vlaneseq
        %v1639 = vshrl.u32 %v1638, 7
        %v1640 = vsub.s32 0, %v1639
        %v1641 = vrot.slane %v1636, %v1640
        %v1642 = vlaneseq
        %v1643 = vshrl.u32 %v1642, 7
        %v1644 = vsub.s32 1, %v1643
        %v1645 = vrot.slane %v1636, %v1644
        %1646 = vrot.lane.b32.xlu0 %v1641, 18
        %v1647 = vpop.permute.xlu0 %1646
        %1648 = vrot.lane.b32.xlu0 %v1645, 18
        %v1649 = vpop.permute.xlu0 %1648
        %v1650 = vsel %vm556, %v1647, %v1649
        %v1654 = vmul.f32 %v1630, %v1647
        %v1655 = vmul.f32 %v1631, %v1650
        %v1656 = vmul.f32 %v1632, %v1649
        %v1657 = vmul.f32 %v1633, %v1647
        %v1658 = vmul.f32 %v1634, %v1650
        %v1659 = vmul.f32 %v1635, %v1649
        %v1666 = vrot.slane %v1654, 4
        %v1667 = vrot.slane %v1655, 4
        %v1668 = vrot.slane %v1656, 4
        %v1669 = vrot.slane %v1657, 4
        %v1670 = vsel %vm726, %v1666, %v1669
        %v1671 = vrot.slane %v1658, 4
        %v1672 = vsel %vm726, %v1667, %v1671
        %v1673 = vrot.slane %v1659, 4
        %v1674 = vsel %vm726, %v1668, %v1673
        %1675 = vrot.lane.b32.xlu0 %v1666, 110
        %v1676 = vpop.permute.xlu0 %1675
        %1677 = vrot.lane.b32.xlu0 %v1667, 110
        %v1678 = vpop.permute.xlu0 %1677
        %1679 = vrot.lane.b32.xlu0 %v1668, 110
        %v1680 = vpop.permute.xlu0 %1679
        %1681 = vrot.lane.b32.xlu0 %v1670, 110
        %v1682 = vpop.permute.xlu0 %1681
        %1683 = vrot.lane.b32.xlu0 %v1672, 110
        %v1684 = vpop.permute.xlu0 %1683
        %1685 = vrot.lane.b32.xlu0 %v1674, 110
        %v1686 = vpop.permute.xlu0 %1685
        %v1687 = vsel %vm576, %v1676, %v1678
        %v1688 = vsel %vm576, %v1678, %v1680
        %v1689 = vsel %vm576, %v1682, %v1684
        %v1690 = vsel %vm576, %v1684, %v1686
        %1695 = vst [vmem:[#allocation4 + $0x70] sm:$0xf0] %v1687
        %1696 = vst [vmem:[#allocation4 + $0x78] sm:$0xf0] %v1688
        %1697 = vst [vmem:[#allocation4 + $0x80] sm:$0xff] %v1689
        %1698 = vst [vmem:[#allocation4 + $0x88] sm:$0xff] %v1690
        %v1699 = vld [vmem:[#allocation3] sm:$0xff]
        %v1700 = vld [vmem:[#allocation3 + $0x8] sm:$0xff]
        %v1701 = vld [vmem:[#allocation3 + $0x10] sm:$0xff]
        %v1702 = vld [vmem:[#allocation3 + $0x18] sm:$0xf]
        %v1703 = vld [vmem:[#allocation3 + $0x20] sm:$0xf]
        %v1704 = vld [vmem:[#allocation3 + $0x28] sm:$0xf]
        %v1705 = vld [vmem:[%s586] ss:$8 sm:$0x3]
        %v1707 = vlaneseq
        %v1708 = vshrl.u32 %v1707, 7
        %v1709 = vsub.s32 0, %v1708
        %v1710 = vrot.slane %v1705, %v1709
        %v1711 = vlaneseq
        %v1712 = vshrl.u32 %v1711, 7
        %v1713 = vsub.s32 1, %v1712
        %v1714 = vrot.slane %v1705, %v1713
        %1715 = vrot.lane.b32.xlu0 %v1710, 32
        %v1716 = vpop.permute.xlu0 %1715
        %1717 = vrot.lane.b32.xlu0 %v1714, 32
        %v1718 = vpop.permute.xlu0 %1717
        %v1719 = vsel %vm601, %v1716, %v1718
        %v1723 = vmul.f32 %v1699, %v1716
        %v1724 = vmul.f32 %v1700, %v1719
        %v1725 = vmul.f32 %v1701, %v1718
        %v1726 = vmul.f32 %v1702, %v1716
        %v1727 = vmul.f32 %v1703, %v1719
        %v1728 = vmul.f32 %v1704, %v1718
        %1735 = vrot.lane.b32.xlu0 %v1723, 96
        %v1736 = vpop.permute.xlu0 %1735
        %1737 = vrot.lane.b32.xlu0 %v1724, 96
        %v1738 = vpop.permute.xlu0 %1737
        %1739 = vrot.lane.b32.xlu0 %v1725, 96
        %v1740 = vpop.permute.xlu0 %1739
        %1741 = vrot.lane.b32.xlu0 %v1726, 96
        %v1742 = vpop.permute.xlu0 %1741
        %1743 = vrot.lane.b32.xlu0 %v1727, 96
        %v1744 = vpop.permute.xlu0 %1743
        %1745 = vrot.lane.b32.xlu0 %v1728, 96
        %v1746 = vpop.permute.xlu0 %1745
        %v1747 = vsel %vm618, %v1736, %v1738
        %v1748 = vsel %vm618, %v1738, %v1740
        %v1749 = vsel %vm618, %v1742, %v1744
        %v1750 = vsel %vm618, %v1744, %v1746
        %1755 = vst [vmem:[#allocation4 + $0x90] sm:$0xff] %v1747
        %1756 = vst [vmem:[#allocation4 + $0x98] sm:$0xff] %v1748
        %1757 = vst [vmem:[#allocation4 + $0xa0] sm:$0xf] %v1749
        %1758 = vst [vmem:[#allocation4 + $0xa8] sm:$0xf] %v1750
        %v1759 = vld [vmem:[#allocation3] sm:$0xff]
        %v1760 = vld [vmem:[#allocation3 + $0x8] sm:$0xff]
        %v1761 = vld [vmem:[#allocation3 + $0x10] sm:$0xff]
        %v1762 = vld [vmem:[#allocation3 + $0x18] sm:$0xf]
        %v1763 = vld [vmem:[#allocation3 + $0x20] sm:$0xf]
        %v1764 = vld [vmem:[#allocation3 + $0x28] sm:$0xf]
        %v1765 = vld [vmem:[%s628] ss:$8 sm:$0x3]
        %v1767 = vlaneseq
        %v1768 = vshrl.u32 %v1767, 7
        %v1769 = vsub.s32 0, %v1768
        %v1770 = vrot.slane %v1765, %v1769
        %v1771 = vlaneseq
        %v1772 = vshrl.u32 %v1771, 7
        %v1773 = vsub.s32 1, %v1772
        %v1774 = vrot.slane %v1765, %v1773
        %1775 = vrot.lane.b32.xlu0 %v1770, 33
        %v1776 = vpop.permute.xlu0 %1775
        %1777 = vrot.lane.b32.xlu0 %v1774, 33
        %v1778 = vpop.permute.xlu0 %1777
        %v1779 = vsel %vm643, %v1776, %v1778
        %v1783 = vmul.f32 %v1759, %v1776
        %v1784 = vmul.f32 %v1760, %v1779
        %v1785 = vmul.f32 %v1761, %v1778
        %v1786 = vmul.f32 %v1762, %v1776
        %v1787 = vmul.f32 %v1763, %v1779
        %v1788 = vmul.f32 %v1764, %v1778
        %v1795 = vrot.slane %v1783, 4
        %v1796 = vrot.slane %v1784, 4
        %v1797 = vrot.slane %v1785, 4
        %v1798 = vrot.slane %v1786, 4
        %v1799 = vsel %vm726, %v1795, %v1798
        %v1800 = vrot.slane %v1787, 4
        %v1801 = vsel %vm726, %v1796, %v1800
        %v1802 = vrot.slane %v1788, 4
        %v1803 = vsel %vm726, %v1797, %v1802
        %1804 = vrot.lane.b32.xlu0 %v1795, 95
        %v1805 = vpop.permute.xlu0 %1804
        %1806 = vrot.lane.b32.xlu0 %v1796, 95
        %v1807 = vpop.permute.xlu0 %1806
        %1808 = vrot.lane.b32.xlu0 %v1797, 95
        %v1809 = vpop.permute.xlu0 %1808
        %1810 = vrot.lane.b32.xlu0 %v1799, 95
        %v1811 = vpop.permute.xlu0 %1810
        %1812 = vrot.lane.b32.xlu0 %v1801, 95
        %v1813 = vpop.permute.xlu0 %1812
        %1814 = vrot.lane.b32.xlu0 %v1803, 95
        %v1815 = vpop.permute.xlu0 %1814
        %v1816 = vsel %vm663, %v1805, %v1807
        %v1817 = vsel %vm663, %v1807, %v1809
        %v1818 = vsel %vm663, %v1811, %v1813
        %v1819 = vsel %vm663, %v1813, %v1815
        %1824 = vst [vmem:[#allocation4 + $0xa0] sm:$0xf0] %v1816
        %1825 = vst [vmem:[#allocation4 + $0xa8] sm:$0xf0] %v1817
        %1826 = vst [vmem:[#allocation4 + $0xb0] sm:$0xff] %v1818
        %1827 = vst [vmem:[#allocation4 + $0xb8] sm:$0xff] %v1819
        %v1828 = vld [vmem:[#allocation3] sm:$0xff]
        %v1829 = vld [vmem:[#allocation3 + $0x8] sm:$0xff]
        %v1830 = vld [vmem:[#allocation3 + $0x10] sm:$0xff]
        %v1831 = vld [vmem:[#allocation3 + $0x18] sm:$0xf]
        %v1832 = vld [vmem:[#allocation3 + $0x20] sm:$0xf]
        %v1833 = vld [vmem:[#allocation3 + $0x28] sm:$0xf]
        %v1834 = vld [vmem:[%s673] ss:$8 sm:$0x3]
        %v1836 = vlaneseq
        %v1837 = vshrl.u32 %v1836, 7
        %v1838 = vsub.s32 0, %v1837
        %v1839 = vrot.slane %v1834, %v1838
        %v1840 = vlaneseq
        %v1841 = vshrl.u32 %v1840, 7
        %v1842 = vsub.s32 1, %v1841
        %v1843 = vrot.slane %v1834, %v1842
        %1844 = vrot.lane.b32.xlu0 %v1839, 34
        %v1845 = vpop.permute.xlu0 %1844
        %1846 = vrot.lane.b32.xlu0 %v1843, 34
        %v1847 = vpop.permute.xlu0 %1846
        %v1848 = vsel %vm299, %v1845, %v1847
        %v1852 = vmul.f32 %v1828, %v1845
        %v1853 = vmul.f32 %v1829, %v1848
        %v1854 = vmul.f32 %v1830, %v1847
        %v1855 = vmul.f32 %v1831, %v1845
        %v1856 = vmul.f32 %v1832, %v1848
        %v1857 = vmul.f32 %v1833, %v1847
        %1864 = vrot.lane.b32.xlu0 %v1852, 94
        %v1865 = vpop.permute.xlu0 %1864
        %1866 = vrot.lane.b32.xlu0 %v1853, 94
        %v1867 = vpop.permute.xlu0 %1866
        %1868 = vrot.lane.b32.xlu0 %v1854, 94
        %v1869 = vpop.permute.xlu0 %1868
        %1870 = vrot.lane.b32.xlu0 %v1855, 94
        %v1871 = vpop.permute.xlu0 %1870
        %1872 = vrot.lane.b32.xlu0 %v1856, 94
        %v1873 = vpop.permute.xlu0 %1872
        %1874 = vrot.lane.b32.xlu0 %v1857, 94
        %v1875 = vpop.permute.xlu0 %1874
        %v1876 = vsel %vm704, %v1865, %v1867
        %v1877 = vsel %vm704, %v1867, %v1869
        %v1878 = vsel %vm704, %v1871, %v1873
        %v1879 = vsel %vm704, %v1873, %v1875
        %1884 = vst [vmem:[#allocation4 + $0xc0] sm:$0xff] %v1876
        %1885 = vst [vmem:[#allocation4 + $0xc8] sm:$0xff] %v1877
        %1886 = vst [vmem:[#allocation4 + $0xd0] sm:$0xf] %v1878
        %1887 = vst [vmem:[#allocation4 + $0xd8] sm:$0xf] %v1879
        %v1888 = vld [vmem:[%s6] sm:$0xf]
        %v1889 = vld [vmem:[#allocation4] sm:$0xff]
        %v1890 = vld [vmem:[#allocation4 + $0x8] sm:$0xff]
        %v1891 = vld [vmem:[#allocation4 + $0x10] sm:$0xff]
        %v1892 = vld [vmem:[#allocation4 + $0x18] sm:$0xff]
        %v1893 = vld [vmem:[#allocation4 + $0x20] sm:$0xff]
        %v1894 = vld [vmem:[#allocation4 + $0x28] sm:$0xff]
        %v1895 = vld [vmem:[#allocation4 + $0x30] sm:$0xff]
        %v1896 = vld [vmem:[#allocation4 + $0x38] sm:$0xff]
        %v1897 = vld [vmem:[#allocation4 + $0x40] sm:$0xff]
        %v1898 = vld [vmem:[#allocation4 + $0x48] sm:$0xff]
        %v1899 = vld [vmem:[#allocation4 + $0x50] sm:$0xff]
        %v1900 = vld [vmem:[#allocation4 + $0x58] sm:$0xff]
        %v1901 = vld [vmem:[#allocation4 + $0x60] sm:$0xff]
        %v1902 = vld [vmem:[#allocation4 + $0x68] sm:$0xff]
        %v1903 = vld [vmem:[#allocation4 + $0x70] sm:$0xff]
        %v1904 = vld [vmem:[#allocation4 + $0x78] sm:$0xff]
        %v1905 = vld [vmem:[#allocation4 + $0x80] sm:$0xff]
        %v1906 = vld [vmem:[#allocation4 + $0x88] sm:$0xff]
        %v1907 = vld [vmem:[#allocation4 + $0x90] sm:$0xff]
        %v1908 = vld [vmem:[#allocation4 + $0x98] sm:$0xff]
        %v1909 = vld [vmem:[#allocation4 + $0xa0] sm:$0xff]
        %v1910 = vld [vmem:[#allocation4 + $0xa8] sm:$0xff]
        %v1911 = vld [vmem:[#allocation4 + $0xb0] sm:$0xff]
        %v1912 = vld [vmem:[#allocation4 + $0xb8] sm:$0xff]
        %v1913 = vld [vmem:[#allocation4 + $0xc0] sm:$0xff]
        %v1914 = vld [vmem:[#allocation4 + $0xc8] sm:$0xff]
        %v1915 = vld [vmem:[#allocation4 + $0xd0] sm:$0xf]
        %v1916 = vld [vmem:[#allocation4 + $0xd8] sm:$0xf]
        %vm1917 = vcmask 883712
        %v1919 = vsel %vm1917, %v1888, 0
        %v1922 = vsel %vm726, %v1915, 0
        %v1925 = vsel %vm726, %v1916, 0
        %1927 = vmatprep.subr.mxu0 %v1890
        %1928 = vmatpush1.msra.mxu0 %v1889
        %1929 = vmatprep.subr.mxu0 %v1892
        %1930 = vmatpush1.msra.mxu0 %v1891
        %1931 = vmatprep.subr.mxu0 %v1894
        %1932 = vmatpush1.msra.mxu0 %v1893
        %1933 = vmatprep.subr.mxu0 %v1896
        %1934 = vmatpush1.msra.mxu0 %v1895
        %1935 = vmatprep.subr.mxu0 %v1898
        %1936 = vmatpush1.msra.mxu0 %v1897
        %1937 = vmatprep.subr.mxu0 %v1900
        %1938 = vmatpush1.msra.mxu0 %v1899
        %1939 = vmatprep.subr.mxu0 %v1902
        %1940 = vmatpush1.msra.mxu0 %v1901
        %1941 = vmatprep.subr.mxu0 %v1904
        %1942 = vmatpush1.msra.mxu0 %v1903
        %1943 = vmatprep.subr.mxu0 %v1906
        %1944 = vmatpush1.msra.mxu0 %v1905
        %1945 = vmatprep.subr.mxu0 %v1908
        %1946 = vmatpush1.msra.mxu0 %v1907
        %1947 = vmatprep.subr.mxu0 %v1910
        %1948 = vmatpush1.msra.mxu0 %v1909
        %1949 = vmatprep.subr.mxu0 %v1912
        %1950 = vmatpush1.msra.mxu0 %v1911
        %1951 = vmatprep.subr.mxu0 %v1914
        %1952 = vmatpush1.msra.mxu0 %v1913
        %1953 = vmatprep.subr.mxu0 %v1925
        %1954 = vmatpush1.msra.mxu0 %v1922
        %1955 = vmatprep.subr.mxu0 0.0
        %1956 = vmatpush1.msra.mxu0 0.0
        %1957 = vmatprep.subr.mxu0 0.0
        %1958 = vmatpush1.msra.mxu0 0.0
        %1959 = vmatprep.subr.mxu0 0.0
        %1960 = vmatpush1.msra.mxu0 0.0
        %1961 = vmatprep.subr.mxu0 0.0
        %1962 = vmatpush1.msra.mxu0 0.0
        %1963 = vmatprep.subr.mxu0 0.0
        %1964 = vmatpush1.msra.mxu0 0.0
        %1965 = vmatprep.subr.mxu0 0.0
        %1966 = vmatpush1.msra.mxu0 0.0
        %1967 = vmatprep.subr.mxu0 0.0
        %1968 = vmatpush1.msra.mxu0 0.0
        %1969 = vmatprep.subr.mxu0 0.0
        %1970 = vmatpush1.msra.mxu0 0.0
        %1971 = vmatprep.subr.mxu0 0.0
        %1972 = vmatpush1.msra.mxu0 0.0
        %1973 = vmatprep.subr.mxu0 0.0
        %1974 = vmatpush1.msra.mxu0 0.0
        %1975 = vmatprep.subr.mxu0 0.0
        %1976 = vmatpush1.msra.mxu0 0.0
        %1977 = vmatprep.subr.mxu0 0.0
        %1978 = vmatpush1.msra.mxu0 0.0
        %1979 = vmatprep.subr.mxu0 0.0
        %1980 = vmatpush1.msra.mxu0 0.0
        %1981 = vmatprep.subr.mxu0 0.0
        %1982 = vmatpush1.msra.mxu0 0.0
        %1983 = vmatprep.subr.mxu0 0.0
        %1984 = vmatpush1.msra.mxu0 0.0
        %1985 = vmatprep.subr.mxu0 0.0
        %1986 = vmatpush1.msra.mxu0 0.0
        %1987 = vmatprep.subr.mxu0 0.0
        %1988 = vmatpush1.msra.mxu0 0.0
        %1989 = vmatprep.subr.mxu0 0.0
        %1990 = vmatpush1.msra.mxu0 0.0
        %1991 = vmatprep.mubr.f32.mxu0 0.0
        %1992 = vmatmul.mubr.f32.gmra.mrb[0].mxu0 %v1919
        %v1993 = vpop.f32.mrb[0].mxu0
        %v1994 = vadd.f32 0.0, %v1993
        %v1995 = vpop.f32.mrb[0].mxu0
        %v1996 = vadd.f32 0.0, %v1995
        %1997 = vdwg.mxu0
        %v2000 = vrot.slane %v1994, 4
        %v2001 = vrot.slane %v1996, 4
        %2004 = vst [vmem:[#allocation2 + $0x10] sm:$0xf0] %v2000
        %2005 = vst [vmem:[#allocation2 + $0x18] sm:$0xf0] %v2001
        %2006 = vst [vmem:[%s296 + $0x10] sm:$0xf] %v1994
        %2007 = vst [vmem:[%s296 + $0x18] sm:$0xf] %v1996
        %p2008 = scmp.lt.s32.totalorder %s21, 1
        %s2009 = scalar_select %p2008, %s21, 1
        %s2010 = smul.addr %s2009, 4
        %s2011 = smul.addr %s2010, 8
        %s2012 = scalar_lea.vmem %s7, %s2011
        // Predicated region
        $region53: #{tpu_custom_call.1} parent=47 // pred_check
          %p2013 = pneg %p191
        $region54: #{tpu_custom_call.1} parent=47 // pred_check_branch
          %2015 = sbr.rel (%p2013) target = $region56
        $region55: #{tpu_custom_call.1} parent=47 // pred_region
          _
        $region56: #{tpu_custom_call.1} parent=47 // pred_fallthru
          _
      $region48: #{tpu_custom_call.1} parent=5 // pred_fallthru
        _
      %p2016 = scmp.le.s32.totalorder 2, %s16
      // Predicated region
      $region57: #{tpu_custom_call.1} parent=5 // pred_check
        %p2017 = pneg %p2016
      $region58: #{tpu_custom_call.1} parent=5 // pred_check_branch
        %2019 = sbr.rel (%p2017) target = $region60
      $region59: #{tpu_custom_call.1} parent=5 // pred_region
        %s2020 = ssub.s32 %s16, 2
        // Predicated region
        $region61: #{tpu_custom_call.1} parent=59 // pred_check
          %p2021 = pneg %p197
        $region62: #{tpu_custom_call.1} parent=59 // pred_check_branch
          %2023 = sbr.rel (%p2021) target = $region64
        $region63: #{tpu_custom_call.1} parent=59 // pred_region
          %p2024 = scmp.lt.s32.totalorder %s22, 1
          %s2025 = scalar_select %p2024, %s22, 1
          %s2026 = smul.addr %s2025, 4
          %s2027 = smul.addr %s2026, 8
          %s2028 = scalar_lea.vmem %s7, %s2027
        $region64: #{tpu_custom_call.1} parent=59 // pred_fallthru
          _
      $region60: #{tpu_custom_call.1} parent=5 // pred_fallthru
        _
    $region6: #{tpu_custom_call.1} parent=1 // loop_footer
      %s20 = sadd.s32 1, %s16
    $region7: #{tpu_custom_call.1} parent=1 // loop_footer_branch
      %15 = sbr.rel target = $region3
    $region8: #{tpu_custom_call.1} parent=1 // loop_exit
      _
    %2029 = vsyncpa [#allocation6], 1
    %s2030 = scalar_lea.sflag [#allocation6], 1
    %2031 = vsyncpa %s2030, 1

</llo_original>
